<compile_context>
chip_gen: v7x
topology: tpu7x:2x2x1
jax: 0.10.0
libtpu: 0.0.40
codegen_flags: <defaults>
</compile_context>

<pallas_src>
import functools
import math

import jax
import jax.numpy as jnp
from jax.experimental import pallas as pl
from jax.experimental.pallas import tpu as pltpu


def _round_up(x, m):
    return (x + m - 1) // m * m


def _vmem_capacity_bytes():
    try:
        info = pltpu.get_tpu_info()
        cap = getattr(info, "vmem_capacity_bytes", None)
        if cap:
            return int(cap)
    except Exception:
        pass
    return 64 * 1024 * 1024  # conservative (v7x per-TensorCore)


def _conv1d_kernel(x_ref, w_ref, b_ref, o_ref, *,
                   kernel_size, stride, dilation, tile_l, window_l, stacked):
    # x_ref: (1, C_in, L_x)      padded row, resident across the L tiles
    # w_ref: (C_out, K*C_in) if stacked else (K, C_out, C_in)
    # b_ref: (C_out, 1)          f32 bias
    # o_ref: (1, C_out, tile_l)  lane-dense output tile
    c_out = o_ref.shape[1]
    c_in = x_ref.shape[1]
    j = pl.program_id(1)
    bias = b_ref[...].astype(jnp.float32)            # (C_out, 1)

    if stride == 1:
        # Load one 128-aligned window (tile + halo), take K static tap slices.
        base = pl.multiple_of(j * tile_l, 128)
        xwin = x_ref[0, :, pl.ds(base, window_l)]    # (C_in, window_l)
        if stacked:
            # Fold K into the contraction: one (C_out, K*C_in) @ (K*C_in, TL)
            # MXU matmul per tile (K-fold fewer push/drain sequences).
            taps = [jax.lax.slice(xwin, (0, k * dilation),
                                  (c_in, k * dilation + tile_l))
                    for k in range(kernel_size)]
            rhs = taps[0] if kernel_size == 1 else jnp.concatenate(taps, axis=0)
            acc = jnp.dot(w_ref[...], rhs,
                          preferred_element_type=jnp.float32) + bias
        else:
            acc = jnp.broadcast_to(bias, (c_out, tile_l))
            for k in range(kernel_size):
                off = k * dilation
                xk = jax.lax.slice(xwin, (0, off), (c_in, off + tile_l))
                acc = acc + jnp.dot(w_ref[k], xk,
                                    preferred_element_type=jnp.float32)
    else:
        # TODO(synk): stride > 1 (unused by Tacotron2 ConvNorm call sites) uses
        # lane-strided pl.ds reads and is not reference-checked / optimized.
        base = j * (tile_l * stride)
        acc = jnp.broadcast_to(bias, (c_out, tile_l))
        for k in range(kernel_size):
            xk = x_ref[0, :, pl.ds(base + k * dilation, tile_l, stride)]
            acc = acc + jnp.dot(w_ref[k], xk,
                                preferred_element_type=jnp.float32)

    o_ref[0] = acc.astype(o_ref.dtype)


def conv_norm_forward(x, w, b, *, stride=1, dilation=1, padding=None,
                      tile_l=None, compute_dtype=jnp.bfloat16):
    """Pallas implementation of ConvNorm.forward (Conv1d with 'same'-style padding)."""
    B, c_in, L = x.shape
    c_out, c_in_w, K = w.shape
    assert c_in == c_in_w
    if padding is None:
        assert K % 2 == 1
        padding = int(dilation * (K - 1) / 2)

    out_dtype = x.dtype
    if compute_dtype is None:
        compute_dtype = x.dtype
    L_out = (L + 2 * padding - dilation * (K - 1) - 1) // stride + 1
    assert L_out > 0

    vmem_cap = _vmem_capacity_bytes()

    # Lane-dense output tiling (no output padding; ragged last tile is masked).
    if tile_l is None:
        default_tile = 1024 if vmem_cap >= 96 * 1024 * 1024 else 512
        tile_l = min(default_tile, _round_up(L_out, 128))
    tile_l = _round_up(tile_l, 128)
    n_tiles = pl.cdiv(L_out, tile_l)

    halo = dilation * (K - 1)
    window_l = tile_l + (_round_up(halo, 128) if halo > 0 else 0)

    # Pad x so every tap read of every (possibly ragged) output tile is in bounds.
    # TODO(synk): handle 'same' padding in-kernel (mask boundary halos) to avoid
    # this wrapper-side HBM round trip of x.
    if stride == 1:
        L_x = (n_tiles - 1) * tile_l + window_l
    else:
        L_x = (n_tiles * tile_l - 1) * stride + halo + 1
    L_x = max(L_x, L + 2 * padding)
    L_x = _round_up(L_x, 128)

    x_c = x.astype(compute_dtype)                      # cast before pad (half the bytes)
    x_pad = jnp.pad(x_c, ((0, 0), (0, 0), (padding, L_x - L - padding)))

    # Weight layout: fold K into the contraction when channels are sublane-aligned,
    # otherwise tap-major (K, C_out, C_in) so w_ref[k] is a free leading-dim select.
    use_stacked = (stride == 1) and (K == 1 or c_in % 8 == 0)
    if use_stacked:
        w_k = jnp.transpose(w, (0, 2, 1)).reshape(c_out, K * c_in).astype(compute_dtype)
        w_block = (c_out, K * c_in)
        w_index_map = lambda bi, j: (0, 0)
    else:
        w_k = jnp.transpose(w, (2, 0, 1)).astype(compute_dtype)
        w_block = (K, c_out, c_in)
        w_index_map = lambda bi, j: (0, 0, 0)
    b2d = b.reshape(c_out, 1).astype(jnp.float32)

    kernel = functools.partial(
        _conv1d_kernel, kernel_size=K, stride=stride, dilation=dilation,
        tile_l=tile_l, window_l=window_l, stacked=use_stacked)

    comp_isz = jnp.dtype(compute_dtype).itemsize
    out_isz = jnp.dtype(out_dtype).itemsize

    # VMEM budget (conservative: assumes double-buffered x/weights/out + f32 acc
    # + window + tap temporaries), clamped to ~85% of this chip's VMEM.
    vmem_need = (
        2 * c_in * L_x * comp_isz
        + 2 * K * c_out * c_in * comp_isz
        + 2 * _round_up(c_out, 8) * 128 * 4
        + 2 * c_out * tile_l * out_isz
        + c_out * tile_l * 4
        + c_in * window_l * comp_isz
        + (K + 1) * c_in * tile_l * comp_isz
    )
    vmem_limit = int(min(max(2 * vmem_need, 32 * 1024 * 1024),
                         int(0.85 * vmem_cap)))

    cost = pl.CostEstimate(
        flops=2 * B * c_out * c_in * K * L_out,
        transcendentals=0,
        bytes_accessed=int(x_pad.size * comp_isz + w_k.size * comp_isz
                           + c_out * 4 + B * c_out * L_out * out_isz),
    )

    def _call(resident_pipeline_kwargs):
        grid_spec = pltpu.PrefetchScalarGridSpec(
            num_scalar_prefetch=0,
            grid=(B, n_tiles),
            in_specs=[
                # Full padded x row, resident across the L tiles of a batch.
                pl.BlockSpec((1, c_in, L_x), lambda bi, j: (bi, 0, 0),
                             **resident_pipeline_kwargs),
                # Weights: constant block index over the whole grid.
                pl.BlockSpec(w_block, w_index_map, **resident_pipeline_kwargs),
                pl.BlockSpec((c_out, 1), lambda bi, j: (0, 0)),
            ],
            out_specs=pl.BlockSpec((1, c_out, tile_l), lambda bi, j: (bi, 0, j)),
        )
        return pl.pallas_call(
            kernel,
            out_shape=jax.ShapeDtypeStruct((B, c_out, L_out), out_dtype),
            grid_spec=grid_spec,
            compiler_params=pltpu.CompilerParams(
                dimension_semantics=("parallel", "parallel"),
                vmem_limit_bytes=vmem_limit,
            ),
            cost_estimate=cost,
        )(x_pad, w_k, b2d)

    if hasattr(pl, "Buffered"):
        try:
            # x / weights have a constant block index along the L-tile axis;
            # single-buffering them halves resident VMEM (matters on v7x's 64 MiB).
            return _call(dict(pipeline_mode=pl.Buffered(1)))
        except Exception:
            pass  # TODO(synk): pipeline_mode single-buffering unsupported here.
    return _call({})


def init_conv_norm_params(key, in_channels, out_channels, kernel_size, gain=1.0):
    """Deterministic parameter init matching ConvNorm.__init__ semantics."""
    kw, kb = jax.random.split(key)
    # Xavier uniform with gain (w_init_gain='linear' -> gain=1.0)
    fan_in = in_channels * kernel_size
    fan_out = out_channels * kernel_size
    bound_w = gain * math.sqrt(6.0 / (fan_in + fan_out))
    w = jax.random.uniform(
        kw, (out_channels, in_channels, kernel_size), jnp.float32, -bound_w, bound_w)
    # PyTorch Conv1d default bias init: U(-1/sqrt(fan_in), 1/sqrt(fan_in))
    bound_b = 1.0 / math.sqrt(fan_in)
    b = jax.random.uniform(kb, (out_channels,), jnp.float32, -bound_b, bound_b)
    return w, b


if __name__ == "__main__":
    key = jax.random.PRNGKey(0)
    k_x, k_p, k_x2, k_p2, k_x3, k_p3 = jax.random.split(key, 6)

    # --- Test 1: exact f32 path, C_in not sublane-aligned (per-tap branch) ---
    B, C_in, C_out, L, K = 2, 4, 8, 16, 5
    x = jax.random.normal(k_x, (B, C_in, L), jnp.float32)
    w, b = init_conv_norm_params(k_p, C_in, C_out, K, gain=1.0)
    y = jax.block_until_ready(
        conv_norm_forward(x, w, b, stride=1, dilation=1, compute_dtype=jnp.float32))
    pad = (K - 1) // 2
    y_ref = jax.lax.conv_general_dilated(
        x, w, (1,), [(pad, pad)],
        dimension_numbers=("NCH", "OIH", "NCH")) + b.reshape(1, C_out, 1)
    assert y.shape == (B, C_out, L)
    assert jnp.allclose(y, y_ref, atol=1e-4, rtol=1e-4)

    # --- Test 2: default bf16 operands, dilation=2, multi-tile (stacked branch) ---
    B2, C2i, C2o, L2, K2, dil2 = 1, 16, 32, 300, 5, 2
    x2 = jax.random.normal(k_x2, (B2, C2i, L2), jnp.float32)
    w2, b2 = init_conv_norm_params(k_p2, C2i, C2o, K2, gain=1.0)
    y2 = jax.block_until_ready(
        conv_norm_forward(x2, w2, b2, stride=1, dilation=dil2, tile_l=128))
    pad2 = dil2 * (K2 - 1) // 2
    x2r = x2.astype(jnp.bfloat16).astype(jnp.float32)
    w2r = w2.astype(jnp.bfloat16).astype(jnp.float32)
    y2_ref = jax.lax.conv_general_dilated(
        x2r, w2r, (1,), [(pad2, pad2)], rhs_dilation=(dil2,),
        dimension_numbers=("NCH", "OIH", "NCH")) + b2.reshape(1, C2o, 1)
    assert y2.shape == (B2, C2o, L2)
    assert jnp.allclose(y2, y2_ref, atol=2e-2, rtol=2e-2)

    # --- Test 3: kernel_size=1 (ConvNorm default), default bf16 operands ---
    B3, C3i, C3o, L3 = 2, 8, 16, 64
    x3 = jax.random.normal(k_x3, (B3, C3i, L3), jnp.float32)
    w3, b3 = init_conv_norm_params(k_p3, C3i, C3o, 1, gain=1.0)
    y3 = jax.block_until_ready(conv_norm_forward(x3, w3, b3))
    x3r = x3.astype(jnp.bfloat16).astype(jnp.float32)
    w3r = w3.astype(jnp.bfloat16).astype(jnp.float32)
    y3_ref = jnp.einsum("oik,bil->bol", w3r, x3r) + b3.reshape(1, C3o, 1)
    assert y3.shape == (B3, C3o, L3)
    assert jnp.allclose(y3, y3_ref, atol=2e-2, rtol=2e-2)

    print("KERNEL_OK")
</pallas_src>

<mosaic_0001>
module attributes {stable_mosaic.version = 11 : i64} {
  func.func @_conv1d_kernel(%arg0: i32, %arg1: i32, %arg2: memref<1x4x256xf32, #tpu.memory_space<vmem>>, %arg3: memref<5x8x4xf32, #tpu.memory_space<vmem>>, %arg4: memref<8x1xf32, #tpu.memory_space<vmem>>, %arg5: memref<1x8x128xf32, #tpu.memory_space<vmem>>) attributes {dimension_semantics = [#tpu.dimension_semantics<parallel>, #tpu.dimension_semantics<parallel>], iteration_bounds = array<i64: 2, 1>, scalar_prefetch = 0 : i64, scratch_operands = 0 : i64, tpu.core_type = #tpu.core_type<tc>, window_params = [{pipeline_mode = #tpu.pipeline_mode<synchronous>, transform_indices = @transform_0, window_bounds = array<i64: 1, 4, 256>}, {pipeline_mode = #tpu.pipeline_mode<synchronous>, transform_indices = @transform_1, window_bounds = array<i64: 5, 8, 4>}, {pipeline_mode = #tpu.pipeline_mode<synchronous>, transform_indices = @transform_2, window_bounds = array<i64: 8, 1>}, {transform_indices = @transform_3, window_bounds = array<i64: 1, 8, 128>}]} {
    %c0 = arith.constant 0 : index
    %c0_0 = arith.constant 0 : index
    %0 = vector.load %arg4[%c0, %c0_0] : memref<8x1xf32, #tpu.memory_space<vmem>>, vector<8x1xf32>
    %c128_i32 = arith.constant 128 : i32
    %1 = arith.muli %arg1, %c128_i32 : i32
    %2 = tpu.assume_multiple %1, 128 : i32
    %c0_1 = arith.constant 0 : index
    %c0_2 = arith.constant 0 : index
    %3 = arith.index_cast %2 : i32 to index
    %4 = vector.load %arg2[%c0_1, %c0_2, %3] : memref<1x4x256xf32, #tpu.memory_space<vmem>>, vector<1x4x256xf32>
    %5 = vector.shape_cast %4 : vector<1x4x256xf32> to vector<4x256xf32>
    %6 = vector.shape_cast %0 : vector<8x1xf32> to vector<8x1xf32>
    %7 = vector.broadcast %6 : vector<8x1xf32> to vector<8x128xf32>
    %8 = vector.extract_strided_slice %5 {offsets = [0, 0], sizes = [4, 128], strides = [1, 1]} : vector<4x256xf32> to vector<4x128xf32>
    %c0_3 = arith.constant 0 : index
    %c0_4 = arith.constant 0 : index
    %c0_5 = arith.constant 0 : index
    %9 = vector.load %arg3[%c0_3, %c0_4, %c0_5] : memref<5x8x4xf32, #tpu.memory_space<vmem>>, vector<1x8x4xf32>
    %10 = vector.shape_cast %9 : vector<1x8x4xf32> to vector<8x4xf32>
    %cst = arith.constant dense<0.000000e+00> : vector<8x128xf32>
    %11 = tpu.matmul %10, %8, %cst {dimension_numbers = #tpu.dot_dimension_numbers<[1], [0], [0], [1], [0, 0, 1, 1], [], []>} : vector<8x4xf32>, vector<4x128xf32>, vector<8x128xf32> -> vector<8x128xf32>
    %12 = arith.addf %7, %11 : vector<8x128xf32>
    %13 = vector.extract_strided_slice %5 {offsets = [0, 1], sizes = [4, 128], strides = [1, 1]} : vector<4x256xf32> to vector<4x128xf32>
    %c1 = arith.constant 1 : index
    %c0_6 = arith.constant 0 : index
    %c0_7 = arith.constant 0 : index
    %14 = vector.load %arg3[%c1, %c0_6, %c0_7] : memref<5x8x4xf32, #tpu.memory_space<vmem>>, vector<1x8x4xf32>
    %15 = vector.shape_cast %14 : vector<1x8x4xf32> to vector<8x4xf32>
    %cst_8 = arith.constant dense<0.000000e+00> : vector<8x128xf32>
    %16 = tpu.matmul %15, %13, %cst_8 {dimension_numbers = #tpu.dot_dimension_numbers<[1], [0], [0], [1], [0, 0, 1, 1], [], []>} : vector<8x4xf32>, vector<4x128xf32>, vector<8x128xf32> -> vector<8x128xf32>
    %17 = arith.addf %12, %16 : vector<8x128xf32>
    %18 = vector.extract_strided_slice %5 {offsets = [0, 2], sizes = [4, 128], strides = [1, 1]} : vector<4x256xf32> to vector<4x128xf32>
    %c2 = arith.constant 2 : index
    %c0_9 = arith.constant 0 : index
    %c0_10 = arith.constant 0 : index
    %19 = vector.load %arg3[%c2, %c0_9, %c0_10] : memref<5x8x4xf32, #tpu.memory_space<vmem>>, vector<1x8x4xf32>
    %20 = vector.shape_cast %19 : vector<1x8x4xf32> to vector<8x4xf32>
    %cst_11 = arith.constant dense<0.000000e+00> : vector<8x128xf32>
    %21 = tpu.matmul %20, %18, %cst_11 {dimension_numbers = #tpu.dot_dimension_numbers<[1], [0], [0], [1], [0, 0, 1, 1], [], []>} : vector<8x4xf32>, vector<4x128xf32>, vector<8x128xf32> -> vector<8x128xf32>
    %22 = arith.addf %17, %21 : vector<8x128xf32>
    %23 = vector.extract_strided_slice %5 {offsets = [0, 3], sizes = [4, 128], strides = [1, 1]} : vector<4x256xf32> to vector<4x128xf32>
    %c3 = arith.constant 3 : index
    %c0_12 = arith.constant 0 : index
    %c0_13 = arith.constant 0 : index
    %24 = vector.load %arg3[%c3, %c0_12, %c0_13] : memref<5x8x4xf32, #tpu.memory_space<vmem>>, vector<1x8x4xf32>
    %25 = vector.shape_cast %24 : vector<1x8x4xf32> to vector<8x4xf32>
    %cst_14 = arith.constant dense<0.000000e+00> : vector<8x128xf32>
    %26 = tpu.matmul %25, %23, %cst_14 {dimension_numbers = #tpu.dot_dimension_numbers<[1], [0], [0], [1], [0, 0, 1, 1], [], []>} : vector<8x4xf32>, vector<4x128xf32>, vector<8x128xf32> -> vector<8x128xf32>
    %27 = arith.addf %22, %26 : vector<8x128xf32>
    %28 = vector.extract_strided_slice %5 {offsets = [0, 4], sizes = [4, 128], strides = [1, 1]} : vector<4x256xf32> to vector<4x128xf32>
    %c4 = arith.constant 4 : index
    %c0_15 = arith.constant 0 : index
    %c0_16 = arith.constant 0 : index
    %29 = vector.load %arg3[%c4, %c0_15, %c0_16] : memref<5x8x4xf32, #tpu.memory_space<vmem>>, vector<1x8x4xf32>
    %30 = vector.shape_cast %29 : vector<1x8x4xf32> to vector<8x4xf32>
    %cst_17 = arith.constant dense<0.000000e+00> : vector<8x128xf32>
    %31 = tpu.matmul %30, %28, %cst_17 {dimension_numbers = #tpu.dot_dimension_numbers<[1], [0], [0], [1], [0, 0, 1, 1], [], []>} : vector<8x4xf32>, vector<4x128xf32>, vector<8x128xf32> -> vector<8x128xf32>
    %32 = arith.addf %27, %31 : vector<8x128xf32>
    %c0_18 = arith.constant 0 : index
    %c0_19 = arith.constant 0 : index
    %c0_20 = arith.constant 0 : index
    %33 = vector.load %arg5[%c0_18, %c0_19, %c0_20] : memref<1x8x128xf32, #tpu.memory_space<vmem>>, vector<1x8x128xf32>
    %34 = vector.shape_cast %33 : vector<1x8x128xf32> to vector<8x128xf32>
    %35 = vector.shape_cast %32 : vector<8x128xf32> to vector<1x8x128xf32>
    tpu.vector_store %arg5[%c0_18, %c0_19, %c0_20], %35 {strides = array<i32>} : memref<1x8x128xf32, #tpu.memory_space<vmem>>, vector<1x8x128xf32>,
    return
  }
  func.func @transform_0(%arg0: i32, %arg1: i32) -> (i32, i32, i32) {
    %c0_i32 = arith.constant 0 : i32
    %c0_i32_0 = arith.constant 0 : i32
    %c0_i32_1 = arith.constant 0 : i32
    return %arg0, %c0_i32, %c0_i32_0 : i32, i32, i32
  }
  func.func @transform_1(%arg0: i32, %arg1: i32) -> (i32, i32, i32) {
    %c0_i32 = arith.constant 0 : i32
    %c0_i32_0 = arith.constant 0 : i32
    %c0_i32_1 = arith.constant 0 : i32
    %c0_i32_2 = arith.constant 0 : i32
    return %c0_i32, %c0_i32_0, %c0_i32_1 : i32, i32, i32
  }
  func.func @transform_2(%arg0: i32, %arg1: i32) -> (i32, i32) {
    %c0_i32 = arith.constant 0 : i32
    %c0_i32_0 = arith.constant 0 : i32
    %c0_i32_1 = arith.constant 0 : i32
    return %c0_i32, %c0_i32_0 : i32, i32
  }
  func.func @transform_3(%arg0: i32, %arg1: i32) -> (i32, i32, i32) {
    %c0_i32 = arith.constant 0 : i32
    %c0_i32_0 = arith.constant 0 : i32
    return %arg0, %c0_i32, %arg1 : i32, i32, i32
  }
}

module attributes {stable_mosaic.version = 11 : i64} {
  func.func @_conv1d_kernel(%arg0: i32, %arg1: i32, %arg2: memref<1x4x256xf32, #tpu.memory_space<vmem>>, %arg3: memref<5x8x4xf32, #tpu.memory_space<vmem>>, %arg4: memref<8x1xf32, #tpu.memory_space<vmem>>, %arg5: memref<1x8x128xf32, #tpu.memory_space<vmem>>) attributes {dimension_semantics = [#tpu.dimension_semantics<parallel>, #tpu.dimension_semantics<parallel>], iteration_bounds = array<i64: 2, 1>, scalar_prefetch = 0 : i64, scratch_operands = 0 : i64, tpu.core_type = #tpu.core_type<tc>, window_params = [{transform_indices = @transform_0, window_bounds = array<i64: 1, 4, 256>}, {pipeline_mode = #tpu.pipeline_mode<synchronous>, transform_indices = @transform_1, window_bounds = array<i64: 5, 8, 4>}, {pipeline_mode = #tpu.pipeline_mode<synchronous>, transform_indices = @transform_2, window_bounds = array<i64: 8, 1>}, {transform_indices = @transform_3, window_bounds = array<i64: 1, 8, 128>}]} {
    %c0 = arith.constant 0 : index
    %c0_0 = arith.constant 0 : index
    %0 = vector.load %arg4[%c0, %c0_0] : memref<8x1xf32, #tpu.memory_space<vmem>>, vector<8x1xf32>
    %c128_i32 = arith.constant 128 : i32
    %1 = arith.muli %arg1, %c128_i32 : i32
    %2 = tpu.assume_multiple %1, 128 : i32
    %c0_1 = arith.constant 0 : index
    %c0_2 = arith.constant 0 : index
    %3 = arith.index_cast %2 : i32 to index
    %4 = vector.load %arg2[%c0_1, %c0_2, %3] : memref<1x4x256xf32, #tpu.memory_space<vmem>>, vector<1x4x256xf32>
    %5 = vector.shape_cast %4 : vector<1x4x256xf32> to vector<4x256xf32>
    %6 = vector.shape_cast %0 : vector<8x1xf32> to vector<8x1xf32>
    %7 = vector.broadcast %6 : vector<8x1xf32> to vector<8x128xf32>
    %8 = vector.extract_strided_slice %5 {offsets = [0, 0], sizes = [4, 128], strides = [1, 1]} : vector<4x256xf32> to vector<4x128xf32>
    %c0_3 = arith.constant 0 : index
    %c0_4 = arith.constant 0 : index
    %c0_5 = arith.constant 0 : index
    %9 = vector.load %arg3[%c0_3, %c0_4, %c0_5] : memref<5x8x4xf32, #tpu.memory_space<vmem>>, vector<1x8x4xf32>
    %10 = vector.shape_cast %9 : vector<1x8x4xf32> to vector<8x4xf32>
    %cst = arith.constant dense<0.000000e+00> : vector<8x128xf32>
    %11 = tpu.matmul %10, %8, %cst {dimension_numbers = #tpu.dot_dimension_numbers<[1], [0], [0], [1], [0, 0, 1, 1], [], []>} : vector<8x4xf32>, vector<4x128xf32>, vector<8x128xf32> -> vector<8x128xf32>
    %12 = arith.addf %7, %11 : vector<8x128xf32>
    %13 = vector.extract_strided_slice %5 {offsets = [0, 1], sizes = [4, 128], strides = [1, 1]} : vector<4x256xf32> to vector<4x128xf32>
    %c1 = arith.constant 1 : index
    %c0_6 = arith.constant 0 : index
    %c0_7 = arith.constant 0 : index
    %14 = vector.load %arg3[%c1, %c0_6, %c0_7] : memref<5x8x4xf32, #tpu.memory_space<vmem>>, vector<1x8x4xf32>
    %15 = vector.shape_cast %14 : vector<1x8x4xf32> to vector<8x4xf32>
    %cst_8 = arith.constant dense<0.000000e+00> : vector<8x128xf32>
    %16 = tpu.matmul %15, %13, %cst_8 {dimension_numbers = #tpu.dot_dimension_numbers<[1], [0], [0], [1], [0, 0, 1, 1], [], []>} : vector<8x4xf32>, vector<4x128xf32>, vector<8x128xf32> -> vector<8x128xf32>
    %17 = arith.addf %12, %16 : vector<8x128xf32>
    %18 = vector.extract_strided_slice %5 {offsets = [0, 2], sizes = [4, 128], strides = [1, 1]} : vector<4x256xf32> to vector<4x128xf32>
    %c2 = arith.constant 2 : index
    %c0_9 = arith.constant 0 : index
    %c0_10 = arith.constant 0 : index
    %19 = vector.load %arg3[%c2, %c0_9, %c0_10] : memref<5x8x4xf32, #tpu.memory_space<vmem>>, vector<1x8x4xf32>
    %20 = vector.shape_cast %19 : vector<1x8x4xf32> to vector<8x4xf32>
    %cst_11 = arith.constant dense<0.000000e+00> : vector<8x128xf32>
    %21 = tpu.matmul %20, %18, %cst_11 {dimension_numbers = #tpu.dot_dimension_numbers<[1], [0], [0], [1], [0, 0, 1, 1], [], []>} : vector<8x4xf32>, vector<4x128xf32>, vector<8x128xf32> -> vector<8x128xf32>
    %22 = arith.addf %17, %21 : vector<8x128xf32>
    %23 = vector.extract_strided_slice %5 {offsets = [0, 3], sizes = [4, 128], strides = [1, 1]} : vector<4x256xf32> to vector<4x128xf32>
    %c3 = arith.constant 3 : index
    %c0_12 = arith.constant 0 : index
    %c0_13 = arith.constant 0 : index
    %24 = vector.load %arg3[%c3, %c0_12, %c0_13] : memref<5x8x4xf32, #tpu.memory_space<vmem>>, vector<1x8x4xf32>
    %25 = vector.shape_cast %24 : vector<1x8x4xf32> to vector<8x4xf32>
    %cst_14 = arith.constant dense<0.000000e+00> : vector<8x128xf32>
    %26 = tpu.matmul %25, %23, %cst_14 {dimension_numbers = #tpu.dot_dimension_numbers<[1], [0], [0], [1], [0, 0, 1, 1], [], []>} : vector<8x4xf32>, vector<4x128xf32>, vector<8x128xf32> -> vector<8x128xf32>
    %27 = arith.addf %22, %26 : vector<8x128xf32>
    %28 = vector.extract_strided_slice %5 {offsets = [0, 4], sizes = [4, 128], strides = [1, 1]} : vector<4x256xf32> to vector<4x128xf32>
    %c4 = arith.constant 4 : index
    %c0_15 = arith.constant 0 : index
    %c0_16 = arith.constant 0 : index
    %29 = vector.load %arg3[%c4, %c0_15, %c0_16] : memref<5x8x4xf32, #tpu.memory_space<vmem>>, vector<1x8x4xf32>
    %30 = vector.shape_cast %29 : vector<1x8x4xf32> to vector<8x4xf32>
    %cst_17 = arith.constant dense<0.000000e+00> : vector<8x128xf32>
    %31 = tpu.matmul %30, %28, %cst_17 {dimension_numbers = #tpu.dot_dimension_numbers<[1], [0], [0], [1], [0, 0, 1, 1], [], []>} : vector<8x4xf32>, vector<4x128xf32>, vector<8x128xf32> -> vector<8x128xf32>
    %32 = arith.addf %27, %31 : vector<8x128xf32>
    %c0_18 = arith.constant 0 : index
    %c0_19 = arith.constant 0 : index
    %c0_20 = arith.constant 0 : index
    %33 = vector.load %arg5[%c0_18, %c0_19, %c0_20] : memref<1x8x128xf32, #tpu.memory_space<vmem>>, vector<1x8x128xf32>
    %34 = vector.shape_cast %33 : vector<1x8x128xf32> to vector<8x128xf32>
    %35 = vector.shape_cast %32 : vector<8x128xf32> to vector<1x8x128xf32>
    tpu.vector_store %arg5[%c0_18, %c0_19, %c0_20], %35 {strides = array<i32>} : memref<1x8x128xf32, #tpu.memory_space<vmem>>, vector<1x8x128xf32>,
    return
  }
  func.func @transform_0(%arg0: i32, %arg1: i32) -> (i32, i32, i32) {
    %c0_i32 = arith.constant 0 : i32
    %c0_i32_0 = arith.constant 0 : i32
    %c0_i32_1 = arith.constant 0 : i32
    return %arg0, %c0_i32, %c0_i32_0 : i32, i32, i32
  }
  func.func @transform_1(%arg0: i32, %arg1: i32) -> (i32, i32, i32) {
    %c0_i32 = arith.constant 0 : i32
    %c0_i32_0 = arith.constant 0 : i32
    %c0_i32_1 = arith.constant 0 : i32
    %c0_i32_2 = arith.constant 0 : i32
    return %c0_i32, %c0_i32_0, %c0_i32_1 : i32, i32, i32
  }
  func.func @transform_2(%arg0: i32, %arg1: i32) -> (i32, i32) {
    %c0_i32 = arith.constant 0 : i32
    %c0_i32_0 = arith.constant 0 : i32
    %c0_i32_1 = arith.constant 0 : i32
    return %c0_i32, %c0_i32_0 : i32, i32
  }
  func.func @transform_3(%arg0: i32, %arg1: i32) -> (i32, i32, i32) {
    %c0_i32 = arith.constant 0 : i32
    %c0_i32_0 = arith.constant 0 : i32
    return %arg0, %c0_i32, %arg1 : i32, i32, i32
  }
}

</mosaic_0001>

<llo_original>
// kernel: tpu_custom_call.1
$region0: #{tpu_custom_call.1}
  #allocation0 [shape = 'u32[]', space=smem, size = 0x4, offset = 0x4, fixed_abs, tag = 'smem constant byte address 0x4 - core index']
  #allocation1 [shape = 'u32[144,128]{1,0:T(1,128)}', space=vmem, size = 0x12000, scoped, tag = 'internal scratch']
  %s0 = inlined_call_operand.vmem [shape: f32[2,4,256], index: 0, kind: input, shape index: {}]
  %s1 = inlined_call_operand.vmem [shape: f32[5,8,4], index: 1, kind: input, shape index: {}]
  %s2 = inlined_call_operand.vmem [shape: f32[8,1], index: 2, kind: input, shape index: {}]
  %s3 = inlined_call_operand.hbm [shape: f32[2,8,16], index: 3, kind: output, shape index: {}]
  %s4 = sld [smem:[#allocation0]]
  $region45: #{tpu_custom_call.1} parent=0
    _
  %s6 = ssub.s32 1, %s4
  %s7 = scalar_select 0, %s6, %s4
  $region1: #{tpu_custom_call.1} parent=0
    #allocation2 [shape = 'u8[8192]{0}', space=vmem, size = 0x2000, scoped, tag = 'output window, operand 0']
    #allocation3 [shape = 's32[2]{0}', space=sflag, size = 0x8, scoped, tag = 'scoped memory for tpu_custom_call.1']
    %8 = vsyncpa [#allocation3], 0
    %s9 = scalar_lea.sflag [#allocation3], 1
    %10 = vsyncpa %s9, 0
    loop: start=0, step=1, limit=4
    $region2: #{tpu_custom_call.1} parent=1 // loop_pre_header
      _
    $region3: #{tpu_custom_call.1} parent=1 // loop_header
      %s12 = sphi 0, %s16
      %p13 = scmp.ge.s32.totalorder %s12, 4
      %s19 = sphi 0, %s31
      %s20 = sphi 0, %s27
      %s21 = sphi 0, %s19
      %s22 = sphi 0, %s20
      %s23 = sphi 0, %s21
      %s24 = sphi 0, %s22
      %s34 = sphi 0, %s36
      %s37 = sphi 0, %s34
      %s38 = sphi 0, %s37
      %s54 = sphi 0, %s38
      %s58 = sphi 0, %s58
      %s60 = sphi 0, %s58
      %s61 = sphi 0, %s60
      %s75 = sphi 0, %s61
      %s79 = sphi 0, %s79
      %s81 = sphi 0, %s79
      %s82 = sphi 0, %s81
      %s96 = sphi 0, %s82
      %s104 = sphi 0, %s106
      %s107 = sphi 0, %s104
      %s108 = sphi 0, %s107
      %s124 = sphi 0, %s108
    $region4: #{tpu_custom_call.1} parent=1 // loop_header_branch
      %15 = sbr.rel (%p13) target = $region8
    $region5: #{tpu_custom_call.1} parent=1 // loop_body
      %s17 = ssub.s32 %s12, 1
      %s18 = ssub.s32 %s12, 2
      %s25 = sadd.s32 1, %s20
      %p26 = scmp.ge.s32.totalorder %s25, 1
      %s27 = scalar_select %p26, 0, %s25
      %s28 = sadd.s32 1, %s19
      %s29 = scalar_select %p26, %s28, %s19
      %p30 = scmp.ge.s32.totalorder %s29, 2
      %s31 = scalar_select %p30, 0, %s29
      %s32 = ssub.s32 %s19, %s31
      %p33 = scmp.eq.s32.totalorder %s32, 0
      %s35 = sadd.s32 %s34, 1
      %s36 = scalar_select %p33, %s34, %s35
      %p39 = pneg %p33
      %p40 = scmp.eq.s32.totalorder %s12, 1
      %p41 = por %p39, %p40
      %p42 = scmp.ne.s32.totalorder %s34, %s37
      %p43 = scmp.eq.s32.totalorder %s12, 0
      %p44 = por %p42, %p43
      %p45 = scmp.ne.s32.totalorder %s34, %s37
      %p46 = scmp.eq.s32.totalorder %s17, 1
      %p47 = por %p45, %p46
      %p48 = scmp.ne.s32.totalorder %s37, %s38
      %p49 = scmp.eq.s32.totalorder %s17, 0
      %p50 = por %p48, %p49
      %p51 = scmp.ne.s32.totalorder %s37, %s38
      %p52 = scmp.eq.s32.totalorder %s18, 1
      %p53 = por %p51, %p52
      %p55 = scmp.ne.s32.totalorder %s38, %s54
      %p56 = scmp.eq.s32.totalorder %s18, 0
      %p57 = por %p55, %p56
      %s59 = sadd.s32 %s58, 1
      %p62 = scmp.eq.s32.totalorder %s12, 1
      %p63 = scmp.ne.s32.totalorder %s58, %s60
      %p64 = scmp.eq.s32.totalorder %s12, 0
      %p65 = por %p63, %p64
      %p66 = scmp.ne.s32.totalorder %s58, %s60
      %p67 = scmp.eq.s32.totalorder %s17, 1
      %p68 = por %p66, %p67
      %p69 = scmp.ne.s32.totalorder %s60, %s61
      %p70 = scmp.eq.s32.totalorder %s17, 0
      %p71 = por %p69, %p70
      %p72 = scmp.ne.s32.totalorder %s60, %s61
      %p73 = scmp.eq.s32.totalorder %s18, 1
      %p74 = por %p72, %p73
      %p76 = scmp.ne.s32.totalorder %s61, %s75
      %p77 = scmp.eq.s32.totalorder %s18, 0
      %p78 = por %p76, %p77
      %s80 = sadd.s32 %s79, 1
      %p83 = scmp.eq.s32.totalorder %s12, 1
      %p84 = scmp.ne.s32.totalorder %s79, %s81
      %p85 = scmp.eq.s32.totalorder %s12, 0
      %p86 = por %p84, %p85
      %p87 = scmp.ne.s32.totalorder %s79, %s81
      %p88 = scmp.eq.s32.totalorder %s17, 1
      %p89 = por %p87, %p88
      %p90 = scmp.ne.s32.totalorder %s81, %s82
      %p91 = scmp.eq.s32.totalorder %s17, 0
      %p92 = por %p90, %p91
      %p93 = scmp.ne.s32.totalorder %s81, %s82
      %p94 = scmp.eq.s32.totalorder %s18, 1
      %p95 = por %p93, %p94
      %p97 = scmp.ne.s32.totalorder %s82, %s96
      %p98 = scmp.eq.s32.totalorder %s18, 0
      %p99 = por %p97, %p98
      %s100 = ssub.s32 %s19, %s31
      %s101 = ssub.s32 %s20, %s27
      %s102 = sor.u32 %s100, %s101
      %p103 = scmp.eq.s32.totalorder %s102, 0
      %s105 = sadd.s32 %s104, 1
      %s106 = scalar_select %p103, %s104, %s105
      %p109 = pneg %p103
      %p110 = scmp.eq.s32.totalorder %s12, 1
      %p111 = por %p109, %p110
      %p112 = scmp.ne.s32.totalorder %s104, %s107
      %p113 = scmp.eq.s32.totalorder %s12, 0
      %p114 = por %p112, %p113
      %p115 = scmp.ne.s32.totalorder %s104, %s107
      %p116 = scmp.eq.s32.totalorder %s17, 1
      %p117 = por %p115, %p116
      %p118 = scmp.ne.s32.totalorder %s107, %s108
      %p119 = scmp.eq.s32.totalorder %s17, 0
      %p120 = por %p118, %p119
      %p121 = scmp.ne.s32.totalorder %s107, %s108
      %p122 = scmp.eq.s32.totalorder %s18, 1
      %p123 = por %p121, %p122
      %p125 = scmp.ne.s32.totalorder %s108, %s124
      %p126 = scmp.eq.s32.totalorder %s18, 0
      %p127 = por %p125, %p126
      %p128 = scmp.le.s32.totalorder 1, %s12
      %p129 = scmp.lt.s32.totalorder %s12, 3
      %p130 = pnand %p128, %p129
      %p131 = pneg %p130
      // Predicated region
      $region9: #{tpu_custom_call.1} parent=5 // pred_check
        _
      $region10: #{tpu_custom_call.1} parent=5 // pred_check_branch
        %133 = sbr.rel (%p130) target = $region12
      $region11: #{tpu_custom_call.1} parent=5 // pred_region
        %s134 = ssub.s32 %s12, 1
        // Predicated region
        $region13: #{tpu_custom_call.1} parent=11 // pred_check
          %p135 = pneg %p50
        $region14: #{tpu_custom_call.1} parent=11 // pred_check_branch
          %137 = sbr.rel (%p135) target = $region16
        $region15: #{tpu_custom_call.1} parent=11 // pred_region
          %p138 = scmp.lt.s32.totalorder %s21, 1
          %s139 = scalar_select %p138, %s21, 1
          %s140 = smul.addr %s139, 2
          %s141 = smul.addr %s140, 4
          %s142 = scalar_lea.vmem %s0, %s141
        $region16: #{tpu_custom_call.1} parent=11 // pred_fallthru
          _
        // Predicated region
        $region17: #{tpu_custom_call.1} parent=11 // pred_check
          %p143 = pneg %p71
        $region18: #{tpu_custom_call.1} parent=11 // pred_check_branch
          %145 = sbr.rel (%p143) target = $region20
        $region19: #{tpu_custom_call.1} parent=11 // pred_region
          _
        $region20: #{tpu_custom_call.1} parent=11 // pred_fallthru
          _
        // Predicated region
        $region21: #{tpu_custom_call.1} parent=11 // pred_check
          %p146 = pneg %p92
        $region22: #{tpu_custom_call.1} parent=11 // pred_check_branch
          %148 = sbr.rel (%p146) target = $region24
        $region23: #{tpu_custom_call.1} parent=11 // pred_region
          _
        $region24: #{tpu_custom_call.1} parent=11 // pred_fallthru
          _
      $region12: #{tpu_custom_call.1} parent=5 // pred_fallthru
        _
      %p149 = scmp.lt.s32.totalorder %s12, 2
      // Predicated region
      $region25: #{tpu_custom_call.1} parent=5 // pred_check
        %p150 = pneg %p149
      $region26: #{tpu_custom_call.1} parent=5 // pred_check_branch
        %152 = sbr.rel (%p150) target = $region28
      $region27: #{tpu_custom_call.1} parent=5 // pred_region
        _
      $region28: #{tpu_custom_call.1} parent=5 // pred_fallthru
        _
      %p153 = scmp.le.s32.totalorder 1, %s12
      %p154 = scmp.lt.s32.totalorder %s12, 3
      %p155 = pnand %p153, %p154
      %p156 = pneg %p155
      // Predicated region
      $region29: #{tpu_custom_call.1} parent=5 // pred_check
        _
      $region30: #{tpu_custom_call.1} parent=5 // pred_check_branch
        %158 = sbr.rel (%p155) target = $region32
      $region31: #{tpu_custom_call.1} parent=5 // pred_region
        %s159 = ssub.s32 %s12, 1
        %p160 = scmp.lt.s32.totalorder %s21, 1
        %s161 = scalar_select %p160, %s21, 1
        %s162 = smul.addr %s161, 2
        %s163 = smul.addr %s162, 4
        %s164 = scalar_lea.vmem %s0, %s163
        %p165 = pneg %p50
        %p166 = pneg %p47
        %p167 = pneg %p71
        %p168 = pneg %p68
        %p169 = pneg %p92
        %p170 = pneg %p89
        %p171 = pneg %p120
        %p172 = pneg %p117
        %s173 = sand.u32 %s107, 1
        %s174 = scalar_lea.sflag [#allocation3], %s173
        %s175 = sand.u32 %s107, 1
        %s176 = smul.addr %s175, 8
        %s177 = scalar_lea.vmem [#allocation2], %s176
        %p178 = scmp.lt.s32.totalorder %s21, 1
        %s179 = scalar_select %p178, %s21, 1
        %s180 = smul.addr %s179, 2
        %s181 = smul.addr %s180, 4
        %s182 = scalar_lea.vmem %s0, %s181
        %v183 = vld [vmem:[%s2] sm:$0xff]
        %s184 = smul.u32 %s22, 128
        %s185 = sshra.s32 %s184, 7
        %s186 = sand.u32 %s184, 127
        %s187 = smul.addr %s185, 4
        %s188 = scalar_lea.vmem %s182, %s187
        %v189 = vld [vmem:[%s188] sm:$0xff]
        %191 = vset.pattern.permute.xlu0 0
        %192 = vperm.xlu0 %191, %v183
        %v193 = vpop.permute.xlu0 %192
        %v195 = vld [vmem:[%s1] sm:$0xff]
        %vm196 = vcmask 31744
        %v198 = vsel %vm196, %v195, 0
        %vm200 = vcmask 1043456
        %v202 = vsel %vm200, %v189, 0
        %204 = vmatprep.subr.mxu0 0.0
        %205 = vmatpush1.msra.mxu0 %v202
        %206 = vmatprep.subr.mxu0 0.0
        %207 = vmatpush1.msra.mxu0 0.0
        %208 = vmatprep.subr.mxu0 0.0
        %209 = vmatpush1.msra.mxu0 0.0
        %210 = vmatprep.subr.mxu0 0.0
        %211 = vmatpush1.msra.mxu0 0.0
        %212 = vmatprep.subr.mxu0 0.0
        %213 = vmatpush1.msra.mxu0 0.0
        %214 = vmatprep.subr.mxu0 0.0
        %215 = vmatpush1.msra.mxu0 0.0
        %216 = vmatprep.subr.mxu0 0.0
        %217 = vmatpush1.msra.mxu0 0.0
        %218 = vmatprep.subr.mxu0 0.0
        %219 = vmatpush1.msra.mxu0 0.0
        %220 = vmatprep.subr.mxu0 0.0
        %221 = vmatpush1.msra.mxu0 0.0
        %222 = vmatprep.subr.mxu0 0.0
        %223 = vmatpush1.msra.mxu0 0.0
        %224 = vmatprep.subr.mxu0 0.0
        %225 = vmatpush1.msra.mxu0 0.0
        %226 = vmatprep.subr.mxu0 0.0
        %227 = vmatpush1.msra.mxu0 0.0
        %228 = vmatprep.subr.mxu0 0.0
        %229 = vmatpush1.msra.mxu0 0.0
        %230 = vmatprep.subr.mxu0 0.0
        %231 = vmatpush1.msra.mxu0 0.0
        %232 = vmatprep.subr.mxu0 0.0
        %233 = vmatpush1.msra.mxu0 0.0
        %234 = vmatprep.subr.mxu0 0.0
        %235 = vmatpush1.msra.mxu0 0.0
        %236 = vmatprep.subr.mxu0 0.0
        %237 = vmatpush1.msra.mxu0 0.0
        %238 = vmatprep.subr.mxu0 0.0
        %239 = vmatpush1.msra.mxu0 0.0
        %240 = vmatprep.subr.mxu0 0.0
        %241 = vmatpush1.msra.mxu0 0.0
        %242 = vmatprep.subr.mxu0 0.0
        %243 = vmatpush1.msra.mxu0 0.0
        %244 = vmatprep.subr.mxu0 0.0
        %245 = vmatpush1.msra.mxu0 0.0
        %246 = vmatprep.subr.mxu0 0.0
        %247 = vmatpush1.msra.mxu0 0.0
        %248 = vmatprep.subr.mxu0 0.0
        %249 = vmatpush1.msra.mxu0 0.0
        %250 = vmatprep.subr.mxu0 0.0
        %251 = vmatpush1.msra.mxu0 0.0
        %252 = vmatprep.subr.mxu0 0.0
        %253 = vmatpush1.msra.mxu0 0.0
        %254 = vmatprep.subr.mxu0 0.0
        %255 = vmatpush1.msra.mxu0 0.0
        %256 = vmatprep.subr.mxu0 0.0
        %257 = vmatpush1.msra.mxu0 0.0
        %258 = vmatprep.subr.mxu0 0.0
        %259 = vmatpush1.msra.mxu0 0.0
        %260 = vmatprep.subr.mxu0 0.0
        %261 = vmatpush1.msra.mxu0 0.0
        %262 = vmatprep.subr.mxu0 0.0
        %263 = vmatpush1.msra.mxu0 0.0
        %264 = vmatprep.subr.mxu0 0.0
        %265 = vmatpush1.msra.mxu0 0.0
        %266 = vmatprep.subr.mxu0 0.0
        %267 = vmatpush1.msra.mxu0 0.0
        %268 = vmatprep.mubr.f32.mxu0 0.0
        %269 = vmatmul.mubr.f32.gmra.mrb[0].mxu0 %v198
        %v270 = vpop.f32.mrb[0].mxu0
        %v271 = vadd.f32 0.0, %v270
        %v272 = vpop.f32.mrb[0].mxu0
        %273 = vdwg.mxu0
        %v274 = vadd.f32 %v193, %v271
        %s275 = scalar_lea.vmem %s1, 8
        %v276 = vld [vmem:[%s275] sm:$0xff]
        %v277 = vcombine.high %v189, %v189
        %278 = vrot.lane.b32.xlu0 %v189, 127
        %v279 = vpop.permute.xlu0 %278
        %280 = vrot.lane.b32.xlu0 %v277, 127
        %v281 = vpop.permute.xlu0 %280
        %vm282 = vcmask 1039360
        %v283 = vsel %vm282, %v279, %v281
        %v285 = vsel %vm196, %v276, 0
        %v287 = vsel %vm200, %v283, 0
        %289 = vmatprep.subr.mxu0 0.0
        %290 = vmatpush1.msra.mxu0 %v287
        %291 = vmatprep.subr.mxu0 0.0
        %292 = vmatpush1.msra.mxu0 0.0
        %293 = vmatprep.subr.mxu0 0.0
        %294 = vmatpush1.msra.mxu0 0.0
        %295 = vmatprep.subr.mxu0 0.0
        %296 = vmatpush1.msra.mxu0 0.0
        %297 = vmatprep.subr.mxu0 0.0
        %298 = vmatpush1.msra.mxu0 0.0
        %299 = vmatprep.subr.mxu0 0.0
        %300 = vmatpush1.msra.mxu0 0.0
        %301 = vmatprep.subr.mxu0 0.0
        %302 = vmatpush1.msra.mxu0 0.0
        %303 = vmatprep.subr.mxu0 0.0
        %304 = vmatpush1.msra.mxu0 0.0
        %305 = vmatprep.subr.mxu0 0.0
        %306 = vmatpush1.msra.mxu0 0.0
        %307 = vmatprep.subr.mxu0 0.0
        %308 = vmatpush1.msra.mxu0 0.0
        %309 = vmatprep.subr.mxu0 0.0
        %310 = vmatpush1.msra.mxu0 0.0
        %311 = vmatprep.subr.mxu0 0.0
        %312 = vmatpush1.msra.mxu0 0.0
        %313 = vmatprep.subr.mxu0 0.0
        %314 = vmatpush1.msra.mxu0 0.0
        %315 = vmatprep.subr.mxu0 0.0
        %316 = vmatpush1.msra.mxu0 0.0
        %317 = vmatprep.subr.mxu0 0.0
        %318 = vmatpush1.msra.mxu0 0.0
        %319 = vmatprep.subr.mxu0 0.0
        %320 = vmatpush1.msra.mxu0 0.0
        %321 = vmatprep.subr.mxu0 0.0
        %322 = vmatpush1.msra.mxu0 0.0
        %323 = vmatprep.subr.mxu0 0.0
        %324 = vmatpush1.msra.mxu0 0.0
        %325 = vmatprep.subr.mxu0 0.0
        %326 = vmatpush1.msra.mxu0 0.0
        %327 = vmatprep.subr.mxu0 0.0
        %328 = vmatpush1.msra.mxu0 0.0
        %329 = vmatprep.subr.mxu0 0.0
        %330 = vmatpush1.msra.mxu0 0.0
        %331 = vmatprep.subr.mxu0 0.0
        %332 = vmatpush1.msra.mxu0 0.0
        %333 = vmatprep.subr.mxu0 0.0
        %334 = vmatpush1.msra.mxu0 0.0
        %335 = vmatprep.subr.mxu0 0.0
        %336 = vmatpush1.msra.mxu0 0.0
        %337 = vmatprep.subr.mxu0 0.0
        %338 = vmatpush1.msra.mxu0 0.0
        %339 = vmatprep.subr.mxu0 0.0
        %340 = vmatpush1.msra.mxu0 0.0
        %341 = vmatprep.subr.mxu0 0.0
        %342 = vmatpush1.msra.mxu0 0.0
        %343 = vmatprep.subr.mxu0 0.0
        %344 = vmatpush1.msra.mxu0 0.0
        %345 = vmatprep.subr.mxu0 0.0
        %346 = vmatpush1.msra.mxu0 0.0
        %347 = vmatprep.subr.mxu0 0.0
        %348 = vmatpush1.msra.mxu0 0.0
        %349 = vmatprep.subr.mxu0 0.0
        %350 = vmatpush1.msra.mxu0 0.0
        %351 = vmatprep.subr.mxu0 0.0
        %352 = vmatpush1.msra.mxu0 0.0
        %353 = vmatprep.mubr.f32.mxu0 0.0
        %354 = vmatmul.mubr.f32.gmra.mrb[0].mxu0 %v285
        %v355 = vpop.f32.mrb[0].mxu0
        %v356 = vadd.f32 0.0, %v355
        %v357 = vpop.f32.mrb[0].mxu0
        %358 = vdwg.mxu0
        %v359 = vadd.f32 %v274, %v356
        %s360 = scalar_lea.vmem %s1, 16
        %v361 = vld [vmem:[%s360] sm:$0xff]
        %362 = vrot.lane.b32.xlu0 %v189, 126
        %v363 = vpop.permute.xlu0 %362
        %364 = vrot.lane.b32.xlu0 %v277, 126
        %v365 = vpop.permute.xlu0 %364
        %vm366 = vcmask 1031168
        %v367 = vsel %vm366, %v363, %v365
        %v369 = vsel %vm196, %v361, 0
        %v371 = vsel %vm200, %v367, 0
        %373 = vmatprep.subr.mxu0 0.0
        %374 = vmatpush1.msra.mxu0 %v371
        %375 = vmatprep.subr.mxu0 0.0
        %376 = vmatpush1.msra.mxu0 0.0
        %377 = vmatprep.subr.mxu0 0.0
        %378 = vmatpush1.msra.mxu0 0.0
        %379 = vmatprep.subr.mxu0 0.0
        %380 = vmatpush1.msra.mxu0 0.0
        %381 = vmatprep.subr.mxu0 0.0
        %382 = vmatpush1.msra.mxu0 0.0
        %383 = vmatprep.subr.mxu0 0.0
        %384 = vmatpush1.msra.mxu0 0.0
        %385 = vmatprep.subr.mxu0 0.0
        %386 = vmatpush1.msra.mxu0 0.0
        %387 = vmatprep.subr.mxu0 0.0
        %388 = vmatpush1.msra.mxu0 0.0
        %389 = vmatprep.subr.mxu0 0.0
        %390 = vmatpush1.msra.mxu0 0.0
        %391 = vmatprep.subr.mxu0 0.0
        %392 = vmatpush1.msra.mxu0 0.0
        %393 = vmatprep.subr.mxu0 0.0
        %394 = vmatpush1.msra.mxu0 0.0
        %395 = vmatprep.subr.mxu0 0.0
        %396 = vmatpush1.msra.mxu0 0.0
        %397 = vmatprep.subr.mxu0 0.0
        %398 = vmatpush1.msra.mxu0 0.0
        %399 = vmatprep.subr.mxu0 0.0
        %400 = vmatpush1.msra.mxu0 0.0
        %401 = vmatprep.subr.mxu0 0.0
        %402 = vmatpush1.msra.mxu0 0.0
        %403 = vmatprep.subr.mxu0 0.0
        %404 = vmatpush1.msra.mxu0 0.0
        %405 = vmatprep.subr.mxu0 0.0
        %406 = vmatpush1.msra.mxu0 0.0
        %407 = vmatprep.subr.mxu0 0.0
        %408 = vmatpush1.msra.mxu0 0.0
        %409 = vmatprep.subr.mxu0 0.0
        %410 = vmatpush1.msra.mxu0 0.0
        %411 = vmatprep.subr.mxu0 0.0
        %412 = vmatpush1.msra.mxu0 0.0
        %413 = vmatprep.subr.mxu0 0.0
        %414 = vmatpush1.msra.mxu0 0.0
        %415 = vmatprep.subr.mxu0 0.0
        %416 = vmatpush1.msra.mxu0 0.0
        %417 = vmatprep.subr.mxu0 0.0
        %418 = vmatpush1.msra.mxu0 0.0
        %419 = vmatprep.subr.mxu0 0.0
        %420 = vmatpush1.msra.mxu0 0.0
        %421 = vmatprep.subr.mxu0 0.0
        %422 = vmatpush1.msra.mxu0 0.0
        %423 = vmatprep.subr.mxu0 0.0
        %424 = vmatpush1.msra.mxu0 0.0
        %425 = vmatprep.subr.mxu0 0.0
        %426 = vmatpush1.msra.mxu0 0.0
        %427 = vmatprep.subr.mxu0 0.0
        %428 = vmatpush1.msra.mxu0 0.0
        %429 = vmatprep.subr.mxu0 0.0
        %430 = vmatpush1.msra.mxu0 0.0
        %431 = vmatprep.subr.mxu0 0.0
        %432 = vmatpush1.msra.mxu0 0.0
        %433 = vmatprep.subr.mxu0 0.0
        %434 = vmatpush1.msra.mxu0 0.0
        %435 = vmatprep.subr.mxu0 0.0
        %436 = vmatpush1.msra.mxu0 0.0
        %437 = vmatprep.mubr.f32.mxu0 0.0
        %438 = vmatmul.mubr.f32.gmra.mrb[0].mxu0 %v369
        %v439 = vpop.f32.mrb[0].mxu0
        %v440 = vadd.f32 0.0, %v439
        %v441 = vpop.f32.mrb[0].mxu0
        %442 = vdwg.mxu0
        %v443 = vadd.f32 %v359, %v440
        %s444 = scalar_lea.vmem %s1, 24
        %v445 = vld [vmem:[%s444] sm:$0xff]
        %446 = vrot.lane.b32.xlu0 %v189, 125
        %v447 = vpop.permute.xlu0 %446
        %448 = vrot.lane.b32.xlu0 %v277, 125
        %v449 = vpop.permute.xlu0 %448
        %vm450 = vcmask 1022976
        %v451 = vsel %vm450, %v447, %v449
        %v453 = vsel %vm196, %v445, 0
        %v455 = vsel %vm200, %v451, 0
        %457 = vmatprep.subr.mxu0 0.0
        %458 = vmatpush1.msra.mxu0 %v455
        %459 = vmatprep.subr.mxu0 0.0
        %460 = vmatpush1.msra.mxu0 0.0
        %461 = vmatprep.subr.mxu0 0.0
        %462 = vmatpush1.msra.mxu0 0.0
        %463 = vmatprep.subr.mxu0 0.0
        %464 = vmatpush1.msra.mxu0 0.0
        %465 = vmatprep.subr.mxu0 0.0
        %466 = vmatpush1.msra.mxu0 0.0
        %467 = vmatprep.subr.mxu0 0.0
        %468 = vmatpush1.msra.mxu0 0.0
        %469 = vmatprep.subr.mxu0 0.0
        %470 = vmatpush1.msra.mxu0 0.0
        %471 = vmatprep.subr.mxu0 0.0
        %472 = vmatpush1.msra.mxu0 0.0
        %473 = vmatprep.subr.mxu0 0.0
        %474 = vmatpush1.msra.mxu0 0.0
        %475 = vmatprep.subr.mxu0 0.0
        %476 = vmatpush1.msra.mxu0 0.0
        %477 = vmatprep.subr.mxu0 0.0
        %478 = vmatpush1.msra.mxu0 0.0
        %479 = vmatprep.subr.mxu0 0.0
        %480 = vmatpush1.msra.mxu0 0.0
        %481 = vmatprep.subr.mxu0 0.0
        %482 = vmatpush1.msra.mxu0 0.0
        %483 = vmatprep.subr.mxu0 0.0
        %484 = vmatpush1.msra.mxu0 0.0
        %485 = vmatprep.subr.mxu0 0.0
        %486 = vmatpush1.msra.mxu0 0.0
        %487 = vmatprep.subr.mxu0 0.0
        %488 = vmatpush1.msra.mxu0 0.0
        %489 = vmatprep.subr.mxu0 0.0
        %490 = vmatpush1.msra.mxu0 0.0
        %491 = vmatprep.subr.mxu0 0.0
        %492 = vmatpush1.msra.mxu0 0.0
        %493 = vmatprep.subr.mxu0 0.0
        %494 = vmatpush1.msra.mxu0 0.0
        %495 = vmatprep.subr.mxu0 0.0
        %496 = vmatpush1.msra.mxu0 0.0
        %497 = vmatprep.subr.mxu0 0.0
        %498 = vmatpush1.msra.mxu0 0.0
        %499 = vmatprep.subr.mxu0 0.0
        %500 = vmatpush1.msra.mxu0 0.0
        %501 = vmatprep.subr.mxu0 0.0
        %502 = vmatpush1.msra.mxu0 0.0
        %503 = vmatprep.subr.mxu0 0.0
        %504 = vmatpush1.msra.mxu0 0.0
        %505 = vmatprep.subr.mxu0 0.0
        %506 = vmatpush1.msra.mxu0 0.0
        %507 = vmatprep.subr.mxu0 0.0
        %508 = vmatpush1.msra.mxu0 0.0
        %509 = vmatprep.subr.mxu0 0.0
        %510 = vmatpush1.msra.mxu0 0.0
        %511 = vmatprep.subr.mxu0 0.0
        %512 = vmatpush1.msra.mxu0 0.0
        %513 = vmatprep.subr.mxu0 0.0
        %514 = vmatpush1.msra.mxu0 0.0
        %515 = vmatprep.subr.mxu0 0.0
        %516 = vmatpush1.msra.mxu0 0.0
        %517 = vmatprep.subr.mxu0 0.0
        %518 = vmatpush1.msra.mxu0 0.0
        %519 = vmatprep.subr.mxu0 0.0
        %520 = vmatpush1.msra.mxu0 0.0
        %521 = vmatprep.mubr.f32.mxu0 0.0
        %522 = vmatmul.mubr.f32.gmra.mrb[0].mxu0 %v453
        %v523 = vpop.f32.mrb[0].mxu0
        %v524 = vadd.f32 0.0, %v523
        %v525 = vpop.f32.mrb[0].mxu0
        %526 = vdwg.mxu0
        %v527 = vadd.f32 %v443, %v524
        %s528 = scalar_lea.vmem %s1, 32
        %v529 = vld [vmem:[%s528] sm:$0xff]
        %530 = vrot.lane.b32.xlu0 %v189, 124
        %v531 = vpop.permute.xlu0 %530
        %532 = vrot.lane.b32.xlu0 %v277, 124
        %v533 = vpop.permute.xlu0 %532
        %vm534 = vcmask 1014784
        %v535 = vsel %vm534, %v531, %v533
        %v537 = vsel %vm196, %v529, 0
        %v539 = vsel %vm200, %v535, 0
        %541 = vmatprep.subr.mxu0 0.0
        %542 = vmatpush1.msra.mxu0 %v539
        %543 = vmatprep.subr.mxu0 0.0
        %544 = vmatpush1.msra.mxu0 0.0
        %545 = vmatprep.subr.mxu0 0.0
        %546 = vmatpush1.msra.mxu0 0.0
        %547 = vmatprep.subr.mxu0 0.0
        %548 = vmatpush1.msra.mxu0 0.0
        %549 = vmatprep.subr.mxu0 0.0
        %550 = vmatpush1.msra.mxu0 0.0
        %551 = vmatprep.subr.mxu0 0.0
        %552 = vmatpush1.msra.mxu0 0.0
        %553 = vmatprep.subr.mxu0 0.0
        %554 = vmatpush1.msra.mxu0 0.0
        %555 = vmatprep.subr.mxu0 0.0
        %556 = vmatpush1.msra.mxu0 0.0
        %557 = vmatprep.subr.mxu0 0.0
        %558 = vmatpush1.msra.mxu0 0.0
        %559 = vmatprep.subr.mxu0 0.0
        %560 = vmatpush1.msra.mxu0 0.0
        %561 = vmatprep.subr.mxu0 0.0
        %562 = vmatpush1.msra.mxu0 0.0
        %563 = vmatprep.subr.mxu0 0.0
        %564 = vmatpush1.msra.mxu0 0.0
        %565 = vmatprep.subr.mxu0 0.0
        %566 = vmatpush1.msra.mxu0 0.0
        %567 = vmatprep.subr.mxu0 0.0
        %568 = vmatpush1.msra.mxu0 0.0
        %569 = vmatprep.subr.mxu0 0.0
        %570 = vmatpush1.msra.mxu0 0.0
        %571 = vmatprep.subr.mxu0 0.0
        %572 = vmatpush1.msra.mxu0 0.0
        %573 = vmatprep.subr.mxu0 0.0
        %574 = vmatpush1.msra.mxu0 0.0
        %575 = vmatprep.subr.mxu0 0.0
        %576 = vmatpush1.msra.mxu0 0.0
        %577 = vmatprep.subr.mxu0 0.0
        %578 = vmatpush1.msra.mxu0 0.0
        %579 = vmatprep.subr.mxu0 0.0
        %580 = vmatpush1.msra.mxu0 0.0
        %581 = vmatprep.subr.mxu0 0.0
        %582 = vmatpush1.msra.mxu0 0.0
        %583 = vmatprep.subr.mxu0 0.0
        %584 = vmatpush1.msra.mxu0 0.0
        %585 = vmatprep.subr.mxu0 0.0
        %586 = vmatpush1.msra.mxu0 0.0
        %587 = vmatprep.subr.mxu0 0.0
        %588 = vmatpush1.msra.mxu0 0.0
        %589 = vmatprep.subr.mxu0 0.0
        %590 = vmatpush1.msra.mxu0 0.0
        %591 = vmatprep.subr.mxu0 0.0
        %592 = vmatpush1.msra.mxu0 0.0
        %593 = vmatprep.subr.mxu0 0.0
        %594 = vmatpush1.msra.mxu0 0.0
        %595 = vmatprep.subr.mxu0 0.0
        %596 = vmatpush1.msra.mxu0 0.0
        %597 = vmatprep.subr.mxu0 0.0
        %598 = vmatpush1.msra.mxu0 0.0
        %599 = vmatprep.subr.mxu0 0.0
        %600 = vmatpush1.msra.mxu0 0.0
        %601 = vmatprep.subr.mxu0 0.0
        %602 = vmatpush1.msra.mxu0 0.0
        %603 = vmatprep.subr.mxu0 0.0
        %604 = vmatpush1.msra.mxu0 0.0
        %605 = vmatprep.mubr.f32.mxu0 0.0
        %606 = vmatmul.mubr.f32.gmra.mrb[0].mxu0 %v537
        %v607 = vpop.f32.mrb[0].mxu0
        %v608 = vadd.f32 0.0, %v607
        %v609 = vpop.f32.mrb[0].mxu0
        %610 = vdwg.mxu0
        %v611 = vadd.f32 %v527, %v608
        %612 = vst [vmem:[%s177] sm:$0xff] %v611
        %s613 = sand.u32 %s107, 1
        %s614 = scalar_lea.sflag [#allocation3], %s613
        %s615 = sand.u32 %s107, 1
        %s616 = smul.addr %s615, 8
        %s617 = scalar_lea.vmem [#allocation2], %s616
        // Predicated region
        $region33: #{tpu_custom_call.1} parent=31 // pred_check
          %p618 = pneg %p117
        $region34: #{tpu_custom_call.1} parent=31 // pred_check_branch
          %620 = sbr.rel (%p618) target = $region36
        $region35: #{tpu_custom_call.1} parent=31 // pred_region
          %s622 = ssub.s32 128, 128
          %623 = vsyncadd %s614, %s622
          %s624 = sadd.s32 %s22, %s21
          %s625 = smul.addr %s624, 128
          %s626 = scalar_lea.hbm %s3, %s625
          %s628 = sshll.u32 %s617, 4
          %s629 = int_to_ptr.vmem [resolvable:$true] %s628
          %631 = dma.vmem_to_hbm [thread:$0]  %s629, 128, %s626, %s614
        $region36: #{tpu_custom_call.1} parent=31 // pred_fallthru
          _
      $region32: #{tpu_custom_call.1} parent=5 // pred_fallthru
        _
      %p632 = scmp.le.s32.totalorder 2, %s12
      // Predicated region
      $region37: #{tpu_custom_call.1} parent=5 // pred_check
        %p633 = pneg %p632
      $region38: #{tpu_custom_call.1} parent=5 // pred_check_branch
        %635 = sbr.rel (%p633) target = $region40
      $region39: #{tpu_custom_call.1} parent=5 // pred_region
        %s636 = ssub.s32 %s12, 2
        // Predicated region
        $region41: #{tpu_custom_call.1} parent=39 // pred_check
          %p637 = pneg %p123
        $region42: #{tpu_custom_call.1} parent=39 // pred_check_branch
          %639 = sbr.rel (%p637) target = $region44
        $region43: #{tpu_custom_call.1} parent=39 // pred_region
          %s640 = sand.u32 %s108, 1
          %s641 = scalar_lea.sflag [#allocation3], %s640
          %s642 = sand.u32 %s108, 1
          %s643 = smul.addr %s642, 8
          %s644 = scalar_lea.vmem [#allocation2], %s643
          %645 = dma.done %s641, 128
        $region44: #{tpu_custom_call.1} parent=39 // pred_fallthru
          _
      $region40: #{tpu_custom_call.1} parent=5 // pred_fallthru
        _
    $region6: #{tpu_custom_call.1} parent=1 // loop_footer
      %s16 = sadd.s32 1, %s12
    $region7: #{tpu_custom_call.1} parent=1 // loop_footer_branch
      %11 = sbr.rel target = $region3
    $region8: #{tpu_custom_call.1} parent=1 // loop_exit
      _
    %646 = vsyncpa [#allocation3], 1
    %s647 = scalar_lea.sflag [#allocation3], 1
    %648 = vsyncpa %s647, 1

// kernel: tpu_custom_call.1
$region0: #{tpu_custom_call.1}
  #allocation0 [shape = 'u32[]', space=smem, size = 0x4, offset = 0x4, fixed_abs, tag = 'smem constant byte address 0x4 - core index']
  #allocation1 [shape = 'u32[144,128]{1,0:T(1,128)}', space=vmem, size = 0x12000, scoped, tag = 'internal scratch']
  %s0 = inlined_call_operand.vmem [shape: f32[2,4,256], index: 0, kind: input, shape index: {}]
  %s1 = inlined_call_operand.vmem [shape: f32[5,8,4], index: 1, kind: input, shape index: {}]
  %s2 = inlined_call_operand.vmem [shape: f32[8,1], index: 2, kind: input, shape index: {}]
  %s3 = inlined_call_operand.hbm [shape: f32[2,8,16], index: 3, kind: output, shape index: {}]
  %s4 = sld [smem:[#allocation0]]
  $region45: #{tpu_custom_call.1} parent=0
    _
  %s6 = ssub.s32 1, %s4
  %s7 = scalar_select 0, %s6, %s4
  $region1: #{tpu_custom_call.1} parent=0
    #allocation2 [shape = 'u8[8192]{0}', space=vmem, size = 0x2000, scoped, tag = 'output window, operand 0']
    #allocation3 [shape = 's32[2]{0}', space=sflag, size = 0x8, scoped, tag = 'scoped memory for tpu_custom_call.1']
    %8 = vsyncpa [#allocation3], 0
    %s9 = scalar_lea.sflag [#allocation3], 1
    %10 = vsyncpa %s9, 0
    loop: start=0, step=1, limit=4
    $region2: #{tpu_custom_call.1} parent=1 // loop_pre_header
      _
    $region3: #{tpu_custom_call.1} parent=1 // loop_header
      %s12 = sphi 0, %s16
      %p13 = scmp.ge.s32.totalorder %s12, 4
      %s19 = sphi 0, %s31
      %s20 = sphi 0, %s27
      %s21 = sphi 0, %s19
      %s22 = sphi 0, %s20
      %s23 = sphi 0, %s21
      %s24 = sphi 0, %s22
      %s34 = sphi 0, %s36
      %s37 = sphi 0, %s34
      %s38 = sphi 0, %s37
      %s54 = sphi 0, %s38
      %s58 = sphi 0, %s58
      %s60 = sphi 0, %s58
      %s61 = sphi 0, %s60
      %s75 = sphi 0, %s61
      %s79 = sphi 0, %s79
      %s81 = sphi 0, %s79
      %s82 = sphi 0, %s81
      %s96 = sphi 0, %s82
      %s104 = sphi 0, %s106
      %s107 = sphi 0, %s104
      %s108 = sphi 0, %s107
      %s124 = sphi 0, %s108
    $region4: #{tpu_custom_call.1} parent=1 // loop_header_branch
      %15 = sbr.rel (%p13) target = $region8
    $region5: #{tpu_custom_call.1} parent=1 // loop_body
      %s17 = ssub.s32 %s12, 1
      %s18 = ssub.s32 %s12, 2
      %s25 = sadd.s32 1, %s20
      %p26 = scmp.ge.s32.totalorder %s25, 1
      %s27 = scalar_select %p26, 0, %s25
      %s28 = sadd.s32 1, %s19
      %s29 = scalar_select %p26, %s28, %s19
      %p30 = scmp.ge.s32.totalorder %s29, 2
      %s31 = scalar_select %p30, 0, %s29
      %s32 = ssub.s32 %s19, %s31
      %p33 = scmp.eq.s32.totalorder %s32, 0
      %s35 = sadd.s32 %s34, 1
      %s36 = scalar_select %p33, %s34, %s35
      %p39 = pneg %p33
      %p40 = scmp.eq.s32.totalorder %s12, 1
      %p41 = por %p39, %p40
      %p42 = scmp.ne.s32.totalorder %s34, %s37
      %p43 = scmp.eq.s32.totalorder %s12, 0
      %p44 = por %p42, %p43
      %p45 = scmp.ne.s32.totalorder %s34, %s37
      %p46 = scmp.eq.s32.totalorder %s17, 1
      %p47 = por %p45, %p46
      %p48 = scmp.ne.s32.totalorder %s37, %s38
      %p49 = scmp.eq.s32.totalorder %s17, 0
      %p50 = por %p48, %p49
      %p51 = scmp.ne.s32.totalorder %s37, %s38
      %p52 = scmp.eq.s32.totalorder %s18, 1
      %p53 = por %p51, %p52
      %p55 = scmp.ne.s32.totalorder %s38, %s54
      %p56 = scmp.eq.s32.totalorder %s18, 0
      %p57 = por %p55, %p56
      %s59 = sadd.s32 %s58, 1
      %p62 = scmp.eq.s32.totalorder %s12, 1
      %p63 = scmp.ne.s32.totalorder %s58, %s60
      %p64 = scmp.eq.s32.totalorder %s12, 0
      %p65 = por %p63, %p64
      %p66 = scmp.ne.s32.totalorder %s58, %s60
      %p67 = scmp.eq.s32.totalorder %s17, 1
      %p68 = por %p66, %p67
      %p69 = scmp.ne.s32.totalorder %s60, %s61
      %p70 = scmp.eq.s32.totalorder %s17, 0
      %p71 = por %p69, %p70
      %p72 = scmp.ne.s32.totalorder %s60, %s61
      %p73 = scmp.eq.s32.totalorder %s18, 1
      %p74 = por %p72, %p73
      %p76 = scmp.ne.s32.totalorder %s61, %s75
      %p77 = scmp.eq.s32.totalorder %s18, 0
      %p78 = por %p76, %p77
      %s80 = sadd.s32 %s79, 1
      %p83 = scmp.eq.s32.totalorder %s12, 1
      %p84 = scmp.ne.s32.totalorder %s79, %s81
      %p85 = scmp.eq.s32.totalorder %s12, 0
      %p86 = por %p84, %p85
      %p87 = scmp.ne.s32.totalorder %s79, %s81
      %p88 = scmp.eq.s32.totalorder %s17, 1
      %p89 = por %p87, %p88
      %p90 = scmp.ne.s32.totalorder %s81, %s82
      %p91 = scmp.eq.s32.totalorder %s17, 0
      %p92 = por %p90, %p91
      %p93 = scmp.ne.s32.totalorder %s81, %s82
      %p94 = scmp.eq.s32.totalorder %s18, 1
      %p95 = por %p93, %p94
      %p97 = scmp.ne.s32.totalorder %s82, %s96
      %p98 = scmp.eq.s32.totalorder %s18, 0
      %p99 = por %p97, %p98
      %s100 = ssub.s32 %s19, %s31
      %s101 = ssub.s32 %s20, %s27
      %s102 = sor.u32 %s100, %s101
      %p103 = scmp.eq.s32.totalorder %s102, 0
      %s105 = sadd.s32 %s104, 1
      %s106 = scalar_select %p103, %s104, %s105
      %p109 = pneg %p103
      %p110 = scmp.eq.s32.totalorder %s12, 1
      %p111 = por %p109, %p110
      %p112 = scmp.ne.s32.totalorder %s104, %s107
      %p113 = scmp.eq.s32.totalorder %s12, 0
      %p114 = por %p112, %p113
      %p115 = scmp.ne.s32.totalorder %s104, %s107
      %p116 = scmp.eq.s32.totalorder %s17, 1
      %p117 = por %p115, %p116
      %p118 = scmp.ne.s32.totalorder %s107, %s108
      %p119 = scmp.eq.s32.totalorder %s17, 0
      %p120 = por %p118, %p119
      %p121 = scmp.ne.s32.totalorder %s107, %s108
      %p122 = scmp.eq.s32.totalorder %s18, 1
      %p123 = por %p121, %p122
      %p125 = scmp.ne.s32.totalorder %s108, %s124
      %p126 = scmp.eq.s32.totalorder %s18, 0
      %p127 = por %p125, %p126
      %p128 = scmp.le.s32.totalorder 1, %s12
      %p129 = scmp.lt.s32.totalorder %s12, 3
      %p130 = pnand %p128, %p129
      %p131 = pneg %p130
      // Predicated region
      $region9: #{tpu_custom_call.1} parent=5 // pred_check
        _
      $region10: #{tpu_custom_call.1} parent=5 // pred_check_branch
        %133 = sbr.rel (%p130) target = $region12
      $region11: #{tpu_custom_call.1} parent=5 // pred_region
        %s134 = ssub.s32 %s12, 1
        // Predicated region
        $region13: #{tpu_custom_call.1} parent=11 // pred_check
          %p135 = pneg %p71
        $region14: #{tpu_custom_call.1} parent=11 // pred_check_branch
          %137 = sbr.rel (%p135) target = $region16
        $region15: #{tpu_custom_call.1} parent=11 // pred_region
          _
        $region16: #{tpu_custom_call.1} parent=11 // pred_fallthru
          _
        // Predicated region
        $region17: #{tpu_custom_call.1} parent=11 // pred_check
          %p138 = pneg %p92
        $region18: #{tpu_custom_call.1} parent=11 // pred_check_branch
          %140 = sbr.rel (%p138) target = $region20
        $region19: #{tpu_custom_call.1} parent=11 // pred_region
          _
        $region20: #{tpu_custom_call.1} parent=11 // pred_fallthru
          _
      $region12: #{tpu_custom_call.1} parent=5 // pred_fallthru
        _
      %p141 = scmp.lt.s32.totalorder %s12, 2
      // Predicated region
      $region21: #{tpu_custom_call.1} parent=5 // pred_check
        %p142 = pneg %p141
      $region22: #{tpu_custom_call.1} parent=5 // pred_check_branch
        %144 = sbr.rel (%p142) target = $region24
      $region23: #{tpu_custom_call.1} parent=5 // pred_region
        // Predicated region
        $region25: #{tpu_custom_call.1} parent=23 // pred_check
          %p145 = pneg %p44
        $region26: #{tpu_custom_call.1} parent=23 // pred_check_branch
          %147 = sbr.rel (%p145) target = $region28
        $region27: #{tpu_custom_call.1} parent=23 // pred_region
          %p148 = scmp.lt.s32.totalorder %s19, 1
          %s149 = scalar_select %p148, %s19, 1
          %s150 = smul.addr %s149, 2
          %s151 = smul.addr %s150, 4
          %s152 = scalar_lea.vmem %s0, %s151
        $region28: #{tpu_custom_call.1} parent=23 // pred_fallthru
          _
      $region24: #{tpu_custom_call.1} parent=5 // pred_fallthru
        _
      %p153 = scmp.le.s32.totalorder 1, %s12
      %p154 = scmp.lt.s32.totalorder %s12, 3
      %p155 = pnand %p153, %p154
      %p156 = pneg %p155
      // Predicated region
      $region29: #{tpu_custom_call.1} parent=5 // pred_check
        _
      $region30: #{tpu_custom_call.1} parent=5 // pred_check_branch
        %158 = sbr.rel (%p155) target = $region32
      $region31: #{tpu_custom_call.1} parent=5 // pred_region
        %s159 = ssub.s32 %s12, 1
        %p160 = scmp.lt.s32.totalorder %s21, 1
        %s161 = scalar_select %p160, %s21, 1
        %s162 = smul.addr %s161, 2
        %s163 = smul.addr %s162, 4
        %s164 = scalar_lea.vmem %s0, %s163
        %p165 = pneg %p50
        %p166 = pneg %p47
        %p167 = pneg %p71
        %p168 = pneg %p68
        %p169 = pneg %p92
        %p170 = pneg %p89
        %p171 = pneg %p120
        %p172 = pneg %p117
        %s173 = sand.u32 %s107, 1
        %s174 = scalar_lea.sflag [#allocation3], %s173
        %s175 = sand.u32 %s107, 1
        %s176 = smul.addr %s175, 8
        %s177 = scalar_lea.vmem [#allocation2], %s176
        %p178 = scmp.lt.s32.totalorder %s21, 1
        %s179 = scalar_select %p178, %s21, 1
        %s180 = smul.addr %s179, 2
        %s181 = smul.addr %s180, 4
        %s182 = scalar_lea.vmem %s0, %s181
        %v183 = vld [vmem:[%s2] sm:$0xff]
        %s184 = smul.u32 %s22, 128
        %s185 = sshra.s32 %s184, 7
        %s186 = sand.u32 %s184, 127
        %s187 = smul.addr %s185, 4
        %s188 = scalar_lea.vmem %s182, %s187
        %v189 = vld [vmem:[%s188] sm:$0xff]
        %191 = vset.pattern.permute.xlu0 0
        %192 = vperm.xlu0 %191, %v183
        %v193 = vpop.permute.xlu0 %192
        %v195 = vld [vmem:[%s1] sm:$0xff]
        %vm196 = vcmask 31744
        %v198 = vsel %vm196, %v195, 0
        %vm200 = vcmask 1043456
        %v202 = vsel %vm200, %v189, 0
        %204 = vmatprep.subr.mxu0 0.0
        %205 = vmatpush1.msra.mxu0 %v202
        %206 = vmatprep.subr.mxu0 0.0
        %207 = vmatpush1.msra.mxu0 0.0
        %208 = vmatprep.subr.mxu0 0.0
        %209 = vmatpush1.msra.mxu0 0.0
        %210 = vmatprep.subr.mxu0 0.0
        %211 = vmatpush1.msra.mxu0 0.0
        %212 = vmatprep.subr.mxu0 0.0
        %213 = vmatpush1.msra.mxu0 0.0
        %214 = vmatprep.subr.mxu0 0.0
        %215 = vmatpush1.msra.mxu0 0.0
        %216 = vmatprep.subr.mxu0 0.0
        %217 = vmatpush1.msra.mxu0 0.0
        %218 = vmatprep.subr.mxu0 0.0
        %219 = vmatpush1.msra.mxu0 0.0
        %220 = vmatprep.subr.mxu0 0.0
        %221 = vmatpush1.msra.mxu0 0.0
        %222 = vmatprep.subr.mxu0 0.0
        %223 = vmatpush1.msra.mxu0 0.0
        %224 = vmatprep.subr.mxu0 0.0
        %225 = vmatpush1.msra.mxu0 0.0
        %226 = vmatprep.subr.mxu0 0.0
        %227 = vmatpush1.msra.mxu0 0.0
        %228 = vmatprep.subr.mxu0 0.0
        %229 = vmatpush1.msra.mxu0 0.0
        %230 = vmatprep.subr.mxu0 0.0
        %231 = vmatpush1.msra.mxu0 0.0
        %232 = vmatprep.subr.mxu0 0.0
        %233 = vmatpush1.msra.mxu0 0.0
        %234 = vmatprep.subr.mxu0 0.0
        %235 = vmatpush1.msra.mxu0 0.0
        %236 = vmatprep.subr.mxu0 0.0
        %237 = vmatpush1.msra.mxu0 0.0
        %238 = vmatprep.subr.mxu0 0.0
        %239 = vmatpush1.msra.mxu0 0.0
        %240 = vmatprep.subr.mxu0 0.0
        %241 = vmatpush1.msra.mxu0 0.0
        %242 = vmatprep.subr.mxu0 0.0
        %243 = vmatpush1.msra.mxu0 0.0
        %244 = vmatprep.subr.mxu0 0.0
        %245 = vmatpush1.msra.mxu0 0.0
        %246 = vmatprep.subr.mxu0 0.0
        %247 = vmatpush1.msra.mxu0 0.0
        %248 = vmatprep.subr.mxu0 0.0
        %249 = vmatpush1.msra.mxu0 0.0
        %250 = vmatprep.subr.mxu0 0.0
        %251 = vmatpush1.msra.mxu0 0.0
        %252 = vmatprep.subr.mxu0 0.0
        %253 = vmatpush1.msra.mxu0 0.0
        %254 = vmatprep.subr.mxu0 0.0
        %255 = vmatpush1.msra.mxu0 0.0
        %256 = vmatprep.subr.mxu0 0.0
        %257 = vmatpush1.msra.mxu0 0.0
        %258 = vmatprep.subr.mxu0 0.0
        %259 = vmatpush1.msra.mxu0 0.0
        %260 = vmatprep.subr.mxu0 0.0
        %261 = vmatpush1.msra.mxu0 0.0
        %262 = vmatprep.subr.mxu0 0.0
        %263 = vmatpush1.msra.mxu0 0.0
        %264 = vmatprep.subr.mxu0 0.0
        %265 = vmatpush1.msra.mxu0 0.0
        %266 = vmatprep.subr.mxu0 0.0
        %267 = vmatpush1.msra.mxu0 0.0
        %268 = vmatprep.mubr.f32.mxu0 0.0
        %269 = vmatmul.mubr.f32.gmra.mrb[0].mxu0 %v198
        %v270 = vpop.f32.mrb[0].mxu0
        %v271 = vadd.f32 0.0, %v270
        %v272 = vpop.f32.mrb[0].mxu0
        %273 = vdwg.mxu0
        %v274 = vadd.f32 %v193, %v271
        %s275 = scalar_lea.vmem %s1, 8
        %v276 = vld [vmem:[%s275] sm:$0xff]
        %v277 = vcombine.high %v189, %v189
        %278 = vrot.lane.b32.xlu0 %v189, 127
        %v279 = vpop.permute.xlu0 %278
        %280 = vrot.lane.b32.xlu0 %v277, 127
        %v281 = vpop.permute.xlu0 %280
        %vm282 = vcmask 1039360
        %v283 = vsel %vm282, %v279, %v281
        %v285 = vsel %vm196, %v276, 0
        %v287 = vsel %vm200, %v283, 0
        %289 = vmatprep.subr.mxu0 0.0
        %290 = vmatpush1.msra.mxu0 %v287
        %291 = vmatprep.subr.mxu0 0.0
        %292 = vmatpush1.msra.mxu0 0.0
        %293 = vmatprep.subr.mxu0 0.0
        %294 = vmatpush1.msra.mxu0 0.0
        %295 = vmatprep.subr.mxu0 0.0
        %296 = vmatpush1.msra.mxu0 0.0
        %297 = vmatprep.subr.mxu0 0.0
        %298 = vmatpush1.msra.mxu0 0.0
        %299 = vmatprep.subr.mxu0 0.0
        %300 = vmatpush1.msra.mxu0 0.0
        %301 = vmatprep.subr.mxu0 0.0
        %302 = vmatpush1.msra.mxu0 0.0
        %303 = vmatprep.subr.mxu0 0.0
        %304 = vmatpush1.msra.mxu0 0.0
        %305 = vmatprep.subr.mxu0 0.0
        %306 = vmatpush1.msra.mxu0 0.0
        %307 = vmatprep.subr.mxu0 0.0
        %308 = vmatpush1.msra.mxu0 0.0
        %309 = vmatprep.subr.mxu0 0.0
        %310 = vmatpush1.msra.mxu0 0.0
        %311 = vmatprep.subr.mxu0 0.0
        %312 = vmatpush1.msra.mxu0 0.0
        %313 = vmatprep.subr.mxu0 0.0
        %314 = vmatpush1.msra.mxu0 0.0
        %315 = vmatprep.subr.mxu0 0.0
        %316 = vmatpush1.msra.mxu0 0.0
        %317 = vmatprep.subr.mxu0 0.0
        %318 = vmatpush1.msra.mxu0 0.0
        %319 = vmatprep.subr.mxu0 0.0
        %320 = vmatpush1.msra.mxu0 0.0
        %321 = vmatprep.subr.mxu0 0.0
        %322 = vmatpush1.msra.mxu0 0.0
        %323 = vmatprep.subr.mxu0 0.0
        %324 = vmatpush1.msra.mxu0 0.0
        %325 = vmatprep.subr.mxu0 0.0
        %326 = vmatpush1.msra.mxu0 0.0
        %327 = vmatprep.subr.mxu0 0.0
        %328 = vmatpush1.msra.mxu0 0.0
        %329 = vmatprep.subr.mxu0 0.0
        %330 = vmatpush1.msra.mxu0 0.0
        %331 = vmatprep.subr.mxu0 0.0
        %332 = vmatpush1.msra.mxu0 0.0
        %333 = vmatprep.subr.mxu0 0.0
        %334 = vmatpush1.msra.mxu0 0.0
        %335 = vmatprep.subr.mxu0 0.0
        %336 = vmatpush1.msra.mxu0 0.0
        %337 = vmatprep.subr.mxu0 0.0
        %338 = vmatpush1.msra.mxu0 0.0
        %339 = vmatprep.subr.mxu0 0.0
        %340 = vmatpush1.msra.mxu0 0.0
        %341 = vmatprep.subr.mxu0 0.0
        %342 = vmatpush1.msra.mxu0 0.0
        %343 = vmatprep.subr.mxu0 0.0
        %344 = vmatpush1.msra.mxu0 0.0
        %345 = vmatprep.subr.mxu0 0.0
        %346 = vmatpush1.msra.mxu0 0.0
        %347 = vmatprep.subr.mxu0 0.0
        %348 = vmatpush1.msra.mxu0 0.0
        %349 = vmatprep.subr.mxu0 0.0
        %350 = vmatpush1.msra.mxu0 0.0
        %351 = vmatprep.subr.mxu0 0.0
        %352 = vmatpush1.msra.mxu0 0.0
        %353 = vmatprep.mubr.f32.mxu0 0.0
        %354 = vmatmul.mubr.f32.gmra.mrb[0].mxu0 %v285
        %v355 = vpop.f32.mrb[0].mxu0
        %v356 = vadd.f32 0.0, %v355
        %v357 = vpop.f32.mrb[0].mxu0
        %358 = vdwg.mxu0
        %v359 = vadd.f32 %v274, %v356
        %s360 = scalar_lea.vmem %s1, 16
        %v361 = vld [vmem:[%s360] sm:$0xff]
        %362 = vrot.lane.b32.xlu0 %v189, 126
        %v363 = vpop.permute.xlu0 %362
        %364 = vrot.lane.b32.xlu0 %v277, 126
        %v365 = vpop.permute.xlu0 %364
        %vm366 = vcmask 1031168
        %v367 = vsel %vm366, %v363, %v365
        %v369 = vsel %vm196, %v361, 0
        %v371 = vsel %vm200, %v367, 0
        %373 = vmatprep.subr.mxu0 0.0
        %374 = vmatpush1.msra.mxu0 %v371
        %375 = vmatprep.subr.mxu0 0.0
        %376 = vmatpush1.msra.mxu0 0.0
        %377 = vmatprep.subr.mxu0 0.0
        %378 = vmatpush1.msra.mxu0 0.0
        %379 = vmatprep.subr.mxu0 0.0
        %380 = vmatpush1.msra.mxu0 0.0
        %381 = vmatprep.subr.mxu0 0.0
        %382 = vmatpush1.msra.mxu0 0.0
        %383 = vmatprep.subr.mxu0 0.0
        %384 = vmatpush1.msra.mxu0 0.0
        %385 = vmatprep.subr.mxu0 0.0
        %386 = vmatpush1.msra.mxu0 0.0
        %387 = vmatprep.subr.mxu0 0.0
        %388 = vmatpush1.msra.mxu0 0.0
        %389 = vmatprep.subr.mxu0 0.0
        %390 = vmatpush1.msra.mxu0 0.0
        %391 = vmatprep.subr.mxu0 0.0
        %392 = vmatpush1.msra.mxu0 0.0
        %393 = vmatprep.subr.mxu0 0.0
        %394 = vmatpush1.msra.mxu0 0.0
        %395 = vmatprep.subr.mxu0 0.0
        %396 = vmatpush1.msra.mxu0 0.0
        %397 = vmatprep.subr.mxu0 0.0
        %398 = vmatpush1.msra.mxu0 0.0
        %399 = vmatprep.subr.mxu0 0.0
        %400 = vmatpush1.msra.mxu0 0.0
        %401 = vmatprep.subr.mxu0 0.0
        %402 = vmatpush1.msra.mxu0 0.0
        %403 = vmatprep.subr.mxu0 0.0
        %404 = vmatpush1.msra.mxu0 0.0
        %405 = vmatprep.subr.mxu0 0.0
        %406 = vmatpush1.msra.mxu0 0.0
        %407 = vmatprep.subr.mxu0 0.0
        %408 = vmatpush1.msra.mxu0 0.0
        %409 = vmatprep.subr.mxu0 0.0
        %410 = vmatpush1.msra.mxu0 0.0
        %411 = vmatprep.subr.mxu0 0.0
        %412 = vmatpush1.msra.mxu0 0.0
        %413 = vmatprep.subr.mxu0 0.0
        %414 = vmatpush1.msra.mxu0 0.0
        %415 = vmatprep.subr.mxu0 0.0
        %416 = vmatpush1.msra.mxu0 0.0
        %417 = vmatprep.subr.mxu0 0.0
        %418 = vmatpush1.msra.mxu0 0.0
        %419 = vmatprep.subr.mxu0 0.0
        %420 = vmatpush1.msra.mxu0 0.0
        %421 = vmatprep.subr.mxu0 0.0
        %422 = vmatpush1.msra.mxu0 0.0
        %423 = vmatprep.subr.mxu0 0.0
        %424 = vmatpush1.msra.mxu0 0.0
        %425 = vmatprep.subr.mxu0 0.0
        %426 = vmatpush1.msra.mxu0 0.0
        %427 = vmatprep.subr.mxu0 0.0
        %428 = vmatpush1.msra.mxu0 0.0
        %429 = vmatprep.subr.mxu0 0.0
        %430 = vmatpush1.msra.mxu0 0.0
        %431 = vmatprep.subr.mxu0 0.0
        %432 = vmatpush1.msra.mxu0 0.0
        %433 = vmatprep.subr.mxu0 0.0
        %434 = vmatpush1.msra.mxu0 0.0
        %435 = vmatprep.subr.mxu0 0.0
        %436 = vmatpush1.msra.mxu0 0.0
        %437 = vmatprep.mubr.f32.mxu0 0.0
        %438 = vmatmul.mubr.f32.gmra.mrb[0].mxu0 %v369
        %v439 = vpop.f32.mrb[0].mxu0
        %v440 = vadd.f32 0.0, %v439
        %v441 = vpop.f32.mrb[0].mxu0
        %442 = vdwg.mxu0
        %v443 = vadd.f32 %v359, %v440
        %s444 = scalar_lea.vmem %s1, 24
        %v445 = vld [vmem:[%s444] sm:$0xff]
        %446 = vrot.lane.b32.xlu0 %v189, 125
        %v447 = vpop.permute.xlu0 %446
        %448 = vrot.lane.b32.xlu0 %v277, 125
        %v449 = vpop.permute.xlu0 %448
        %vm450 = vcmask 1022976
        %v451 = vsel %vm450, %v447, %v449
        %v453 = vsel %vm196, %v445, 0
        %v455 = vsel %vm200, %v451, 0
        %457 = vmatprep.subr.mxu0 0.0
        %458 = vmatpush1.msra.mxu0 %v455
        %459 = vmatprep.subr.mxu0 0.0
        %460 = vmatpush1.msra.mxu0 0.0
        %461 = vmatprep.subr.mxu0 0.0
        %462 = vmatpush1.msra.mxu0 0.0
        %463 = vmatprep.subr.mxu0 0.0
        %464 = vmatpush1.msra.mxu0 0.0
        %465 = vmatprep.subr.mxu0 0.0
        %466 = vmatpush1.msra.mxu0 0.0
        %467 = vmatprep.subr.mxu0 0.0
        %468 = vmatpush1.msra.mxu0 0.0
        %469 = vmatprep.subr.mxu0 0.0
        %470 = vmatpush1.msra.mxu0 0.0
        %471 = vmatprep.subr.mxu0 0.0
        %472 = vmatpush1.msra.mxu0 0.0
        %473 = vmatprep.subr.mxu0 0.0
        %474 = vmatpush1.msra.mxu0 0.0
        %475 = vmatprep.subr.mxu0 0.0
        %476 = vmatpush1.msra.mxu0 0.0
        %477 = vmatprep.subr.mxu0 0.0
        %478 = vmatpush1.msra.mxu0 0.0
        %479 = vmatprep.subr.mxu0 0.0
        %480 = vmatpush1.msra.mxu0 0.0
        %481 = vmatprep.subr.mxu0 0.0
        %482 = vmatpush1.msra.mxu0 0.0
        %483 = vmatprep.subr.mxu0 0.0
        %484 = vmatpush1.msra.mxu0 0.0
        %485 = vmatprep.subr.mxu0 0.0
        %486 = vmatpush1.msra.mxu0 0.0
        %487 = vmatprep.subr.mxu0 0.0
        %488 = vmatpush1.msra.mxu0 0.0
        %489 = vmatprep.subr.mxu0 0.0
        %490 = vmatpush1.msra.mxu0 0.0
        %491 = vmatprep.subr.mxu0 0.0
        %492 = vmatpush1.msra.mxu0 0.0
        %493 = vmatprep.subr.mxu0 0.0
        %494 = vmatpush1.msra.mxu0 0.0
        %495 = vmatprep.subr.mxu0 0.0
        %496 = vmatpush1.msra.mxu0 0.0
        %497 = vmatprep.subr.mxu0 0.0
        %498 = vmatpush1.msra.mxu0 0.0
        %499 = vmatprep.subr.mxu0 0.0
        %500 = vmatpush1.msra.mxu0 0.0
        %501 = vmatprep.subr.mxu0 0.0
        %502 = vmatpush1.msra.mxu0 0.0
        %503 = vmatprep.subr.mxu0 0.0
        %504 = vmatpush1.msra.mxu0 0.0
        %505 = vmatprep.subr.mxu0 0.0
        %506 = vmatpush1.msra.mxu0 0.0
        %507 = vmatprep.subr.mxu0 0.0
        %508 = vmatpush1.msra.mxu0 0.0
        %509 = vmatprep.subr.mxu0 0.0
        %510 = vmatpush1.msra.mxu0 0.0
        %511 = vmatprep.subr.mxu0 0.0
        %512 = vmatpush1.msra.mxu0 0.0
        %513 = vmatprep.subr.mxu0 0.0
        %514 = vmatpush1.msra.mxu0 0.0
        %515 = vmatprep.subr.mxu0 0.0
        %516 = vmatpush1.msra.mxu0 0.0
        %517 = vmatprep.subr.mxu0 0.0
        %518 = vmatpush1.msra.mxu0 0.0
        %519 = vmatprep.subr.mxu0 0.0
        %520 = vmatpush1.msra.mxu0 0.0
        %521 = vmatprep.mubr.f32.mxu0 0.0
        %522 = vmatmul.mubr.f32.gmra.mrb[0].mxu0 %v453
        %v523 = vpop.f32.mrb[0].mxu0
        %v524 = vadd.f32 0.0, %v523
        %v525 = vpop.f32.mrb[0].mxu0
        %526 = vdwg.mxu0
        %v527 = vadd.f32 %v443, %v524
        %s528 = scalar_lea.vmem %s1, 32
        %v529 = vld [vmem:[%s528] sm:$0xff]
        %530 = vrot.lane.b32.xlu0 %v189, 124
        %v531 = vpop.permute.xlu0 %530
        %532 = vrot.lane.b32.xlu0 %v277, 124
        %v533 = vpop.permute.xlu0 %532
        %vm534 = vcmask 1014784
        %v535 = vsel %vm534, %v531, %v533
        %v537 = vsel %vm196, %v529, 0
        %v539 = vsel %vm200, %v535, 0
        %541 = vmatprep.subr.mxu0 0.0
        %542 = vmatpush1.msra.mxu0 %v539
        %543 = vmatprep.subr.mxu0 0.0
        %544 = vmatpush1.msra.mxu0 0.0
        %545 = vmatprep.subr.mxu0 0.0
        %546 = vmatpush1.msra.mxu0 0.0
        %547 = vmatprep.subr.mxu0 0.0
        %548 = vmatpush1.msra.mxu0 0.0
        %549 = vmatprep.subr.mxu0 0.0
        %550 = vmatpush1.msra.mxu0 0.0
        %551 = vmatprep.subr.mxu0 0.0
        %552 = vmatpush1.msra.mxu0 0.0
        %553 = vmatprep.subr.mxu0 0.0
        %554 = vmatpush1.msra.mxu0 0.0
        %555 = vmatprep.subr.mxu0 0.0
        %556 = vmatpush1.msra.mxu0 0.0
        %557 = vmatprep.subr.mxu0 0.0
        %558 = vmatpush1.msra.mxu0 0.0
        %559 = vmatprep.subr.mxu0 0.0
        %560 = vmatpush1.msra.mxu0 0.0
        %561 = vmatprep.subr.mxu0 0.0
        %562 = vmatpush1.msra.mxu0 0.0
        %563 = vmatprep.subr.mxu0 0.0
        %564 = vmatpush1.msra.mxu0 0.0
        %565 = vmatprep.subr.mxu0 0.0
        %566 = vmatpush1.msra.mxu0 0.0
        %567 = vmatprep.subr.mxu0 0.0
        %568 = vmatpush1.msra.mxu0 0.0
        %569 = vmatprep.subr.mxu0 0.0
        %570 = vmatpush1.msra.mxu0 0.0
        %571 = vmatprep.subr.mxu0 0.0
        %572 = vmatpush1.msra.mxu0 0.0
        %573 = vmatprep.subr.mxu0 0.0
        %574 = vmatpush1.msra.mxu0 0.0
        %575 = vmatprep.subr.mxu0 0.0
        %576 = vmatpush1.msra.mxu0 0.0
        %577 = vmatprep.subr.mxu0 0.0
        %578 = vmatpush1.msra.mxu0 0.0
        %579 = vmatprep.subr.mxu0 0.0
        %580 = vmatpush1.msra.mxu0 0.0
        %581 = vmatprep.subr.mxu0 0.0
        %582 = vmatpush1.msra.mxu0 0.0
        %583 = vmatprep.subr.mxu0 0.0
        %584 = vmatpush1.msra.mxu0 0.0
        %585 = vmatprep.subr.mxu0 0.0
        %586 = vmatpush1.msra.mxu0 0.0
        %587 = vmatprep.subr.mxu0 0.0
        %588 = vmatpush1.msra.mxu0 0.0
        %589 = vmatprep.subr.mxu0 0.0
        %590 = vmatpush1.msra.mxu0 0.0
        %591 = vmatprep.subr.mxu0 0.0
        %592 = vmatpush1.msra.mxu0 0.0
        %593 = vmatprep.subr.mxu0 0.0
        %594 = vmatpush1.msra.mxu0 0.0
        %595 = vmatprep.subr.mxu0 0.0
        %596 = vmatpush1.msra.mxu0 0.0
        %597 = vmatprep.subr.mxu0 0.0
        %598 = vmatpush1.msra.mxu0 0.0
        %599 = vmatprep.subr.mxu0 0.0
        %600 = vmatpush1.msra.mxu0 0.0
        %601 = vmatprep.subr.mxu0 0.0
        %602 = vmatpush1.msra.mxu0 0.0
        %603 = vmatprep.subr.mxu0 0.0
        %604 = vmatpush1.msra.mxu0 0.0
        %605 = vmatprep.mubr.f32.mxu0 0.0
        %606 = vmatmul.mubr.f32.gmra.mrb[0].mxu0 %v537
        %v607 = vpop.f32.mrb[0].mxu0
        %v608 = vadd.f32 0.0, %v607
        %v609 = vpop.f32.mrb[0].mxu0
        %610 = vdwg.mxu0
        %v611 = vadd.f32 %v527, %v608
        %612 = vst [vmem:[%s177] sm:$0xff] %v611
        %s613 = sand.u32 %s107, 1
        %s614 = scalar_lea.sflag [#allocation3], %s613
        %s615 = sand.u32 %s107, 1
        %s616 = smul.addr %s615, 8
        %s617 = scalar_lea.vmem [#allocation2], %s616
        // Predicated region
        $region33: #{tpu_custom_call.1} parent=31 // pred_check
          %p618 = pneg %p117
        $region34: #{tpu_custom_call.1} parent=31 // pred_check_branch
          %620 = sbr.rel (%p618) target = $region36
        $region35: #{tpu_custom_call.1} parent=31 // pred_region
          %s622 = ssub.s32 128, 128
          %623 = vsyncadd %s614, %s622
          %s624 = sadd.s32 %s22, %s21
          %s625 = smul.addr %s624, 128
          %s626 = scalar_lea.hbm %s3, %s625
          %s628 = sshll.u32 %s617, 4
          %s629 = int_to_ptr.vmem [resolvable:$true] %s628
          %631 = dma.vmem_to_hbm [thread:$0]  %s629, 128, %s626, %s614
        $region36: #{tpu_custom_call.1} parent=31 // pred_fallthru
          _
      $region32: #{tpu_custom_call.1} parent=5 // pred_fallthru
        _
      %p632 = scmp.le.s32.totalorder 2, %s12
      // Predicated region
      $region37: #{tpu_custom_call.1} parent=5 // pred_check
        %p633 = pneg %p632
      $region38: #{tpu_custom_call.1} parent=5 // pred_check_branch
        %635 = sbr.rel (%p633) target = $region40
      $region39: #{tpu_custom_call.1} parent=5 // pred_region
        %s636 = ssub.s32 %s12, 2
        // Predicated region
        $region41: #{tpu_custom_call.1} parent=39 // pred_check
          %p637 = pneg %p123
        $region42: #{tpu_custom_call.1} parent=39 // pred_check_branch
          %639 = sbr.rel (%p637) target = $region44
        $region43: #{tpu_custom_call.1} parent=39 // pred_region
          %s640 = sand.u32 %s108, 1
          %s641 = scalar_lea.sflag [#allocation3], %s640
          %s642 = sand.u32 %s108, 1
          %s643 = smul.addr %s642, 8
          %s644 = scalar_lea.vmem [#allocation2], %s643
          %645 = dma.done %s641, 128
        $region44: #{tpu_custom_call.1} parent=39 // pred_fallthru
          _
      $region40: #{tpu_custom_call.1} parent=5 // pred_fallthru
        _
    $region6: #{tpu_custom_call.1} parent=1 // loop_footer
      %s16 = sadd.s32 1, %s12
    $region7: #{tpu_custom_call.1} parent=1 // loop_footer_branch
      %11 = sbr.rel target = $region3
    $region8: #{tpu_custom_call.1} parent=1 // loop_exit
      _
    %646 = vsyncpa [#allocation3], 1
    %s647 = scalar_lea.sflag [#allocation3], 1
    %648 = vsyncpa %s647, 1

</llo_original>
